<compile_context>
chip_gen: v6e
topology: v6e:2x2x1
jax: 0.10.0
libtpu: 0.0.40
codegen_flags: <defaults>
</compile_context>

<pallas_src>
import functools
import math

import jax
import jax.numpy as jnp
from jax import lax
from jax.experimental import pallas as pl
from jax.experimental.pallas import tpu as pltpu


# ---------------------------------------------------------------------------
# tiling helpers
# ---------------------------------------------------------------------------
def _largest_divisor(n, cap):
    for d in range(min(n, cap), 0, -1):
        if n % d == 0:
            return d
    return 1


def _choose_row_tile(height, width, batch, target_m=1024):
    """Rows per grid step so the in-kernel matmul M ~= target_m (th | height)."""
    max_rows = max(1, target_m // max(width, 1))
    th = _largest_divisor(height, max_rows)
    # keep >= 2 programs on the parallel grid so v7x megacore has work to split
    if batch * (height // th) < 2 and height > 1:
        th = _largest_divisor(height, max(1, height // 2))
    return th


def _choose_m_tile(m, target=2048):
    if m <= target:
        return m
    for t in range(target, 7, -1):
        if m % t == 0 and t % 8 == 0:
            return t
    return m  # fallback: a single full block is always a legal block shape


def _compiler_params(semantics, vmem_bytes):
    kwargs = dict(dimension_semantics=semantics)
    if vmem_bytes > 12 * 1024 * 1024:
        # raise the scoped-VMEM cap only when needed; stay under v7x's 64 MiB
        kwargs["vmem_limit_bytes"] = int(
            min(max(vmem_bytes * 3 // 2, 32 * 1024 * 1024), 56 * 1024 * 1024))
    return pltpu.CompilerParams(**kwargs)


# ---------------------------------------------------------------------------
# Pallas kernel: 1x1 conv == single-K matmul + bias (+ ReLU)
# ---------------------------------------------------------------------------
def _conv1x1_kernel(x_ref, w_ref, b_ref, o_ref, *, relu):
    out = jnp.dot(x_ref[...], w_ref[...], preferred_element_type=jnp.float32)
    out = out + b_ref[...]
    if relu:
        out = jnp.maximum(out, 0.0)
    o_ref[...] = out.astype(o_ref.dtype)


def conv1x1_pallas(x, w, b, relu=False, target_m=2048):
    batch, height, width, cin = x.shape
    cout = w.shape[-1]
    dtype = x.dtype
    esize = jnp.dtype(dtype).itemsize
    m = batch * height * width
    x2 = x.reshape(m, cin)                 # free: NHWC is row-major contiguous
    b2 = b.reshape(1, cout).astype(jnp.float32)
    tm = _choose_m_tile(m, target_m)
    grid = (m // tm,)

    vmem = 2 * esize * (tm * cin + cin * cout + tm * cout) + 8 * cout
    out = pl.pallas_call(
        functools.partial(_conv1x1_kernel, relu=relu),
        out_shape=jax.ShapeDtypeStruct((m, cout), dtype),
        grid_spec=pltpu.PrefetchScalarGridSpec(
            num_scalar_prefetch=0,
            grid=grid,
            in_specs=[
                pl.BlockSpec((tm, cin), lambda i: (i, 0)),
                pl.BlockSpec((cin, cout), lambda i: (0, 0)),
                pl.BlockSpec((1, cout), lambda i: (0, 0)),
            ],
            out_specs=pl.BlockSpec((tm, cout), lambda i: (i, 0)),
        ),
        compiler_params=_compiler_params(("parallel",), vmem),
        cost_estimate=pl.CostEstimate(
            flops=2 * m * cin * cout,
            transcendentals=0,
            bytes_accessed=int(esize * (m * cin + cin * cout + m * cout) + 4 * cout),
        ),
    )(x2, w, b2)
    return out.reshape(batch, height, width, cout)


# ---------------------------------------------------------------------------
# Pallas kernel: fused 3x3 conv (9 in-kernel taps) + bias + ReLU + residual(s)
# ---------------------------------------------------------------------------
def _conv3x3_kernel(x_ref, w_ref, b_ref, *rest, rows, out_w, dot_w, relu, n_res):
    res_refs = rest[:n_res]
    o_ref = rest[n_res]
    cin = x_ref.shape[-1]
    cout = w_ref.shape[-1]
    row0 = pl.program_id(1) * rows

    acc = None
    for dy in range(3):
        for dx in range(3):
            patch = x_ref[0, pl.ds(row0 + dy, rows), pl.ds(dx, dot_w), :]
            # f32 detour keeps the (rows, dot_w, cin) -> (rows*dot_w, cin)
            # collapse on whole sublane tiles; the dot runs in the storage
            # dtype (bf16 in the production config) with f32 accumulation.
            patch = patch.astype(jnp.float32).reshape(rows * dot_w, cin)
            tap = jnp.dot(patch.astype(x_ref.dtype), w_ref[dy, dx, :, :],
                          preferred_element_type=jnp.float32)
            acc = tap if acc is None else acc + tap

    out = acc + b_ref[...]
    if relu:
        out = jnp.maximum(out, 0.0)
    out = out.reshape(rows, dot_w, cout)
    if dot_w != out_w:
        out = out[:, :out_w, :]
    for r in res_refs:                       # fused residual adds (post-ReLU)
        out = out + r[0, :, :, :].astype(jnp.float32)
    o_ref[0, :, :, :] = out.astype(o_ref.dtype)


def conv3x3_pallas(x, w, b, residuals=(), relu=False, target_m=1024):
    batch, height, width, cin = x.shape
    cout = w.shape[-1]
    dtype = x.dtype
    esize = jnp.dtype(dtype).itemsize
    residuals = tuple(residuals)
    n_res = len(residuals)

    # compute-width rounded up to whole sublane tiles so in-kernel reshapes are
    # tile aligned; the (at most 7) extra columns are dropped before the store.
    dot_w = -(-width // 8) * 8
    rows = _choose_row_tile(height, dot_w, batch, target_m)
    xpad = jnp.pad(x, ((0, 0), (1, 1), (1, 1 + dot_w - width), (0, 0)))
    grid = (batch, height // rows)
    b2 = b.reshape(1, cout).astype(jnp.float32)

    in_specs = [
        pl.BlockSpec((1, height + 2, dot_w + 2, cin), lambda bb, tt: (bb, 0, 0, 0)),
        pl.BlockSpec((3, 3, cin, cout), lambda bb, tt: (0, 0, 0, 0)),
        pl.BlockSpec((1, cout), lambda bb, tt: (0, 0)),
    ]
    for _ in range(n_res):
        in_specs.append(
            pl.BlockSpec((1, rows, width, cout), lambda bb, tt: (bb, tt, 0, 0)))
    out_spec = pl.BlockSpec((1, rows, width, cout), lambda bb, tt: (bb, tt, 0, 0))

    vmem = (2 * esize * ((height + 2) * (dot_w + 2) * cin + 9 * cin * cout
                         + (n_res + 1) * rows * width * cout)
            + 8 * cout + 4 * rows * dot_w * cout)
    bytes_accessed = (esize * (xpad.size + w.size
                               + (n_res + 1) * batch * height * width * cout)
                      + 4 * cout)

    return pl.pallas_call(
        functools.partial(_conv3x3_kernel, rows=rows, out_w=width, dot_w=dot_w,
                          relu=relu, n_res=n_res),
        out_shape=jax.ShapeDtypeStruct((batch, height, width, cout), dtype),
        grid_spec=pltpu.PrefetchScalarGridSpec(
            num_scalar_prefetch=0,
            grid=grid,
            in_specs=in_specs,
            out_specs=out_spec,
        ),
        compiler_params=_compiler_params(("parallel", "parallel"), vmem),
        cost_estimate=pl.CostEstimate(
            flops=2 * batch * height * width * 9 * cin * cout,
            transcendentals=0,
            bytes_accessed=int(bytes_accessed),
        ),
    )(xpad, w, b2, *residuals)


# ---------------------------------------------------------------------------
# lax reference convs (same fused signature; used for the correctness checks)
# ---------------------------------------------------------------------------
def conv1x1_ref(x, w, b, relu=False):
    y = lax.dot_general(x, w, (((3,), (0,)), ((), ())),
                        precision=lax.Precision.HIGHEST,
                        preferred_element_type=jnp.float32)
    y = y + b.astype(jnp.float32)
    if relu:
        y = jnp.maximum(y, 0.0)
    return y.astype(x.dtype)


def conv3x3_ref(x, w, b, residuals=(), relu=False):
    y = lax.conv_general_dilated(
        x, w, (1, 1), ((1, 1), (1, 1)),
        dimension_numbers=("NHWC", "HWIO", "NHWC"),
        precision=lax.Precision.HIGHEST,
        preferred_element_type=jnp.float32)
    y = y + b.astype(jnp.float32)
    if relu:
        y = jnp.maximum(y, 0.0)
    for r in residuals:
        y = y + r.astype(jnp.float32)
    return y.astype(x.dtype)


# ---------------------------------------------------------------------------
# F.interpolate(scale_factor=2, mode='bilinear', align_corners=False) on NHWC.
# TODO(synk): fuse this 2x upsample into the following 3x3 conv kernel (phase-
# decomposed stencil); the sublane interleave needed to store a fused upsampled
# tile has no clean Mosaic lowering here, so it stays as XLA gather/lerp glue.
# ---------------------------------------------------------------------------
def upsample2x_bilinear(x):
    _, H, W, _ = x.shape
    dt = x.dtype
    xf = x.astype(jnp.float32)

    def idx(size):
        out = jnp.arange(2 * size, dtype=jnp.float32)
        src = jnp.maximum((out + 0.5) / 2.0 - 0.5, 0.0)   # torch clamps <0 to 0
        i0 = jnp.minimum(jnp.floor(src).astype(jnp.int32), size - 1)
        i1 = jnp.minimum(i0 + 1, size - 1)
        frac = src - i0.astype(jnp.float32)
        return i0, i1, frac

    i0h, i1h, fh = idx(H)
    i0w, i1w, fw = idx(W)
    rows = (xf[:, i0h] * (1.0 - fh)[None, :, None, None]
            + xf[:, i1h] * fh[None, :, None, None])
    out = (rows[:, :, i0w] * (1.0 - fw)[None, None, :, None]
           + rows[:, :, i1w] * fw[None, None, :, None])
    return out.astype(dt)


# ---------------------------------------------------------------------------
# LightDPTDecoder forward (parametrized by the conv implementation)
# ---------------------------------------------------------------------------
def light_dpt_decoder_forward(params, features, conv1x1, conv3x3):
    """features: 4 NHWC tensors (B, h, w, embed_dim) -> (B, 2h, 2w, dim_dhat)."""

    def rcu(x, p, extra=()):
        # ResidualConvUnit: conv-ReLU-conv-ReLU then +x (+ optional fused adds)
        w1, b1, w2, b2 = p
        h = conv3x3(x, w1, b1, relu=True)
        return conv3x3(h, w2, b2, residuals=(x,) + tuple(extra), relu=True)

    # ReassembleBlocks: 1x1 projection + 2x bilinear up, then 3x3 -> dim_dhat
    xs = []
    for i in range(4):
        y = conv1x1(features[i], params["proj_w"][i], params["proj_b"][i])
        y = upsample2x_bilinear(y)
        y = conv3x3(y, params["conv_w"][i], params["conv_b"][i])
        xs.append(y)

    # FeatureFusionBlocks (all levels share the same spatial resolution here)
    out = rcu(xs[-1], params["fusion"][0]["rcu2"])
    for i in range(1, 4):
        out = rcu(xs[-i - 1], params["fusion"][i]["rcu1"], extra=(out,))
        out = rcu(out, params["fusion"][i]["rcu2"])

    # project: 3x3 conv + ReLU
    return conv3x3(out, params["project_w"], params["project_b"], relu=True)


# ---------------------------------------------------------------------------
# deterministic parameter init (PyTorch default conv init ranges)
# ---------------------------------------------------------------------------
def init_params(key, embed_dim, post_process_channels, dim_dhat,
                dtype=jnp.bfloat16):
    keys = iter(jax.random.split(key, 64))

    def conv_params(cin, cout, k):
        kw, kb = next(keys), next(keys)
        bound = 1.0 / math.sqrt(cin * k * k)
        shape = (cin, cout) if k == 1 else (k, k, cin, cout)
        w = jax.random.uniform(kw, shape, jnp.float32, -bound, bound)
        b = jax.random.uniform(kb, (cout,), jnp.float32, -bound, bound)
        return w.astype(dtype), b       # weights in compute dtype, bias f32

    params = {"proj_w": [], "proj_b": [], "conv_w": [], "conv_b": [], "fusion": []}
    for c in post_process_channels:
        w, b = conv_params(embed_dim, c, 1)
        params["proj_w"].append(w)
        params["proj_b"].append(b)
    for c in post_process_channels:
        w, b = conv_params(c, dim_dhat, 3)
        params["conv_w"].append(w)
        params["conv_b"].append(b)

    def rcu_params():
        w1, b1 = conv_params(dim_dhat, dim_dhat, 3)
        w2, b2 = conv_params(dim_dhat, dim_dhat, 3)
        return (w1, b1, w2, b2)

    for i in range(4):
        blk = {}
        if i != 0:
            blk["rcu1"] = rcu_params()
        blk["rcu2"] = rcu_params()
        params["fusion"].append(blk)

    params["project_w"], params["project_b"] = conv_params(dim_dhat, dim_dhat, 3)
    return params


# ---------------------------------------------------------------------------
if __name__ == "__main__":
    B, embed_dim, h, w, dim_dhat = 2, 64, 4, 4, 32
    post_process_channels = [embed_dim // 2 ** (3 - i) for i in range(4)]  # [8,16,32,64]
    compute_dtype = jnp.bfloat16

    key = jax.random.PRNGKey(0)
    kp, kx, ku = jax.random.split(key, 3)

    # --- tight f32 unit checks of the two Pallas kernels (vs lax) -----------
    k1, k2, k3, k4, k5, k6 = jax.random.split(ku, 6)
    xu = jax.random.normal(k1, (2, 5, 6, 16), jnp.float32)
    wu = jax.random.normal(k2, (3, 3, 16, 32), jnp.float32) * 0.1
    bu = jax.random.normal(k3, (32,), jnp.float32) * 0.1
    ru = jax.random.normal(k4, (2, 5, 6, 32), jnp.float32)
    got3 = jax.block_until_ready(conv3x3_pallas(xu, wu, bu, residuals=(ru,), relu=True))
    want3 = conv3x3_ref(xu, wu, bu, residuals=(ru,), relu=True)
    err3 = float(jnp.max(jnp.abs(got3 - want3)))
    assert err3 < 2e-3, f"conv3x3 (f32) mismatch vs lax: {err3}"

    x1 = jax.random.normal(k5, (2, 4, 4, 64), jnp.float32)
    w1 = jax.random.normal(k6, (64, 16), jnp.float32) * 0.1
    b1 = jnp.linspace(-0.1, 0.1, 16, dtype=jnp.float32)
    got1 = jax.block_until_ready(conv1x1_pallas(x1, w1, b1))
    want1 = conv1x1_ref(x1, w1, b1)
    err1 = float(jnp.max(jnp.abs(got1 - want1)))
    assert err1 < 2e-3, f"conv1x1 (f32) mismatch vs lax: {err1}"

    # --- full decoder in the bf16 production config --------------------------
    params = init_params(kp, embed_dim, post_process_channels, dim_dhat,
                         dtype=compute_dtype)
    xkeys = jax.random.split(kx, 4)
    inputs_nchw = [jax.random.normal(xkeys[i], (B, embed_dim, h, w), jnp.float32)
                   for i in range(4)]
    feats = [jnp.transpose(t, (0, 2, 3, 1)).astype(compute_dtype)
             for t in inputs_nchw]

    fwd_pallas = jax.jit(functools.partial(
        light_dpt_decoder_forward, conv1x1=conv1x1_pallas, conv3x3=conv3x3_pallas))
    out_pallas = jax.block_until_ready(fwd_pallas(params, feats))

    out_ref = jax.block_until_ready(
        light_dpt_decoder_forward(params, feats, conv1x1_ref, conv3x3_ref))

    # back to PyTorch NCHW convention: (B, dim_dhat, H/7, W/7) = (B, 32, 2h, 2w)
    out_nchw = jnp.transpose(out_pallas, (0, 3, 1, 2))
    assert out_nchw.shape == (B, dim_dhat, 2 * h, 2 * w), out_nchw.shape
    assert out_pallas.dtype == compute_dtype

    ref32 = out_ref.astype(jnp.float32)
    diff = float(jnp.max(jnp.abs(out_pallas.astype(jnp.float32) - ref32)))
    tol = 8e-2 * max(1.0, float(jnp.max(jnp.abs(ref32))))  # bf16 storage tolerance
    assert diff <= tol, f"bf16 decoder mismatch vs matched lax reference: {diff} > {tol}"
    print("KERNEL_OK")
</pallas_src>

<mosaic_0001>
module attributes {stable_mosaic.version = 11 : i64} {
  func.func @_conv3x3_kernel(%arg0: i32, %arg1: i32, %arg2: memref<1x7x10x16xf32, #tpu.memory_space<vmem>>, %arg3: memref<3x3x16x32xf32, #tpu.memory_space<vmem>>, %arg4: memref<1x32xf32, #tpu.memory_space<vmem>>, %arg5: memref<1x5x6x32xf32, #tpu.memory_space<vmem>>, %arg6: memref<1x5x6x32xf32, #tpu.memory_space<vmem>>) attributes {dimension_semantics = [#tpu.dimension_semantics<parallel>, #tpu.dimension_semantics<parallel>], iteration_bounds = array<i64: 2, 1>, scalar_prefetch = 0 : i64, scratch_operands = 0 : i64, tpu.core_type = #tpu.core_type<tc>, window_params = [{transform_indices = @transform_0, window_bounds = array<i64: 1, 7, 10, 16>}, {pipeline_mode = #tpu.pipeline_mode<synchronous>, transform_indices = @transform_1, window_bounds = array<i64: 3, 3, 16, 32>}, {pipeline_mode = #tpu.pipeline_mode<synchronous>, transform_indices = @transform_2, window_bounds = array<i64: 1, 32>}, {transform_indices = @transform_3, window_bounds = array<i64: 1, 5, 6, 32>}, {transform_indices = @transform_4, window_bounds = array<i64: 1, 5, 6, 32>}]} {
    %c5_i32 = arith.constant 5 : i32
    %0 = arith.muli %arg1, %c5_i32 : i32
    %c0_i32 = arith.constant 0 : i32
    %1 = arith.addi %0, %c0_i32 : i32
    %c0 = arith.constant 0 : index
    %2 = arith.index_cast %1 : i32 to index
    %c0_0 = arith.constant 0 : index
    %c0_1 = arith.constant 0 : index
    %3 = vector.load %arg2[%c0, %2, %c0_0, %c0_1] : memref<1x7x10x16xf32, #tpu.memory_space<vmem>>, vector<1x5x8x16xf32>
    %4 = vector.shape_cast %3 : vector<1x5x8x16xf32> to vector<5x8x16xf32>
    %5 = vector.shape_cast %4 : vector<5x8x16xf32> to vector<40x16xf32>
    %c0_2 = arith.constant 0 : index
    %c0_3 = arith.constant 0 : index
    %c0_4 = arith.constant 0 : index
    %c0_5 = arith.constant 0 : index
    %6 = vector.load %arg3[%c0_2, %c0_3, %c0_4, %c0_5] : memref<3x3x16x32xf32, #tpu.memory_space<vmem>>, vector<1x1x16x32xf32>
    %7 = vector.shape_cast %6 : vector<1x1x16x32xf32> to vector<16x32xf32>
    %cst = arith.constant dense<0.000000e+00> : vector<40x32xf32>
    %8 = tpu.matmul %5, %7, %cst {dimension_numbers = #tpu.dot_dimension_numbers<[1], [0], [0], [1], [0, 0, 1, 1], [], []>} : vector<40x16xf32>, vector<16x32xf32>, vector<40x32xf32> -> vector<40x32xf32>
    %c0_i32_6 = arith.constant 0 : i32
    %9 = arith.addi %0, %c0_i32_6 : i32
    %c0_7 = arith.constant 0 : index
    %10 = arith.index_cast %9 : i32 to index
    %c1 = arith.constant 1 : index
    %c0_8 = arith.constant 0 : index
    %11 = vector.load %arg2[%c0_7, %10, %c1, %c0_8] : memref<1x7x10x16xf32, #tpu.memory_space<vmem>>, vector<1x5x8x16xf32>
    %12 = vector.shape_cast %11 : vector<1x5x8x16xf32> to vector<5x8x16xf32>
    %13 = vector.shape_cast %12 : vector<5x8x16xf32> to vector<40x16xf32>
    %c0_9 = arith.constant 0 : index
    %c1_10 = arith.constant 1 : index
    %c0_11 = arith.constant 0 : index
    %c0_12 = arith.constant 0 : index
    %14 = vector.load %arg3[%c0_9, %c1_10, %c0_11, %c0_12] : memref<3x3x16x32xf32, #tpu.memory_space<vmem>>, vector<1x1x16x32xf32>
    %15 = vector.shape_cast %14 : vector<1x1x16x32xf32> to vector<16x32xf32>
    %cst_13 = arith.constant dense<0.000000e+00> : vector<40x32xf32>
    %16 = tpu.matmul %13, %15, %cst_13 {dimension_numbers = #tpu.dot_dimension_numbers<[1], [0], [0], [1], [0, 0, 1, 1], [], []>} : vector<40x16xf32>, vector<16x32xf32>, vector<40x32xf32> -> vector<40x32xf32>
    %17 = arith.addf %8, %16 : vector<40x32xf32>
    %c0_i32_14 = arith.constant 0 : i32
    %18 = arith.addi %0, %c0_i32_14 : i32
    %c0_15 = arith.constant 0 : index
    %19 = arith.index_cast %18 : i32 to index
    %c2 = arith.constant 2 : index
    %c0_16 = arith.constant 0 : index
    %20 = vector.load %arg2[%c0_15, %19, %c2, %c0_16] : memref<1x7x10x16xf32, #tpu.memory_space<vmem>>, vector<1x5x8x16xf32>
    %21 = vector.shape_cast %20 : vector<1x5x8x16xf32> to vector<5x8x16xf32>
    %22 = vector.shape_cast %21 : vector<5x8x16xf32> to vector<40x16xf32>
    %c0_17 = arith.constant 0 : index
    %c2_18 = arith.constant 2 : index
    %c0_19 = arith.constant 0 : index
    %c0_20 = arith.constant 0 : index
    %23 = vector.load %arg3[%c0_17, %c2_18, %c0_19, %c0_20] : memref<3x3x16x32xf32, #tpu.memory_space<vmem>>, vector<1x1x16x32xf32>
    %24 = vector.shape_cast %23 : vector<1x1x16x32xf32> to vector<16x32xf32>
    %cst_21 = arith.constant dense<0.000000e+00> : vector<40x32xf32>
    %25 = tpu.matmul %22, %24, %cst_21 {dimension_numbers = #tpu.dot_dimension_numbers<[1], [0], [0], [1], [0, 0, 1, 1], [], []>} : vector<40x16xf32>, vector<16x32xf32>, vector<40x32xf32> -> vector<40x32xf32>
    %26 = arith.addf %17, %25 : vector<40x32xf32>
    %c1_i32 = arith.constant 1 : i32
    %27 = arith.addi %0, %c1_i32 : i32
    %c0_22 = arith.constant 0 : index
    %28 = arith.index_cast %27 : i32 to index
    %c0_23 = arith.constant 0 : index
    %c0_24 = arith.constant 0 : index
    %29 = vector.load %arg2[%c0_22, %28, %c0_23, %c0_24] : memref<1x7x10x16xf32, #tpu.memory_space<vmem>>, vector<1x5x8x16xf32>
    %30 = vector.shape_cast %29 : vector<1x5x8x16xf32> to vector<5x8x16xf32>
    %31 = vector.shape_cast %30 : vector<5x8x16xf32> to vector<40x16xf32>
    %c1_25 = arith.constant 1 : index
    %c0_26 = arith.constant 0 : index
    %c0_27 = arith.constant 0 : index
    %c0_28 = arith.constant 0 : index
    %32 = vector.load %arg3[%c1_25, %c0_26, %c0_27, %c0_28] : memref<3x3x16x32xf32, #tpu.memory_space<vmem>>, vector<1x1x16x32xf32>
    %33 = vector.shape_cast %32 : vector<1x1x16x32xf32> to vector<16x32xf32>
    %cst_29 = arith.constant dense<0.000000e+00> : vector<40x32xf32>
    %34 = tpu.matmul %31, %33, %cst_29 {dimension_numbers = #tpu.dot_dimension_numbers<[1], [0], [0], [1], [0, 0, 1, 1], [], []>} : vector<40x16xf32>, vector<16x32xf32>, vector<40x32xf32> -> vector<40x32xf32>
    %35 = arith.addf %26, %34 : vector<40x32xf32>
    %c1_i32_30 = arith.constant 1 : i32
    %36 = arith.addi %0, %c1_i32_30 : i32
    %c0_31 = arith.constant 0 : index
    %37 = arith.index_cast %36 : i32 to index
    %c1_32 = arith.constant 1 : index
    %c0_33 = arith.constant 0 : index
    %38 = vector.load %arg2[%c0_31, %37, %c1_32, %c0_33] : memref<1x7x10x16xf32, #tpu.memory_space<vmem>>, vector<1x5x8x16xf32>
    %39 = vector.shape_cast %38 : vector<1x5x8x16xf32> to vector<5x8x16xf32>
    %40 = vector.shape_cast %39 : vector<5x8x16xf32> to vector<40x16xf32>
    %c1_34 = arith.constant 1 : index
    %c1_35 = arith.constant 1 : index
    %c0_36 = arith.constant 0 : index
    %c0_37 = arith.constant 0 : index
    %41 = vector.load %arg3[%c1_34, %c1_35, %c0_36, %c0_37] : memref<3x3x16x32xf32, #tpu.memory_space<vmem>>, vector<1x1x16x32xf32>
    %42 = vector.shape_cast %41 : vector<1x1x16x32xf32> to vector<16x32xf32>
    %cst_38 = arith.constant dense<0.000000e+00> : vector<40x32xf32>
    %43 = tpu.matmul %40, %42, %cst_38 {dimension_numbers = #tpu.dot_dimension_numbers<[1], [0], [0], [1], [0, 0, 1, 1], [], []>} : vector<40x16xf32>, vector<16x32xf32>, vector<40x32xf32> -> vector<40x32xf32>
    %44 = arith.addf %35, %43 : vector<40x32xf32>
    %c1_i32_39 = arith.constant 1 : i32
    %45 = arith.addi %0, %c1_i32_39 : i32
    %c0_40 = arith.constant 0 : index
    %46 = arith.index_cast %45 : i32 to index
    %c2_41 = arith.constant 2 : index
    %c0_42 = arith.constant 0 : index
    %47 = vector.load %arg2[%c0_40, %46, %c2_41, %c0_42] : memref<1x7x10x16xf32, #tpu.memory_space<vmem>>, vector<1x5x8x16xf32>
    %48 = vector.shape_cast %47 : vector<1x5x8x16xf32> to vector<5x8x16xf32>
    %49 = vector.shape_cast %48 : vector<5x8x16xf32> to vector<40x16xf32>
    %c1_43 = arith.constant 1 : index
    %c2_44 = arith.constant 2 : index
    %c0_45 = arith.constant 0 : index
    %c0_46 = arith.constant 0 : index
    %50 = vector.load %arg3[%c1_43, %c2_44, %c0_45, %c0_46] : memref<3x3x16x32xf32, #tpu.memory_space<vmem>>, vector<1x1x16x32xf32>
    %51 = vector.shape_cast %50 : vector<1x1x16x32xf32> to vector<16x32xf32>
    %cst_47 = arith.constant dense<0.000000e+00> : vector<40x32xf32>
    %52 = tpu.matmul %49, %51, %cst_47 {dimension_numbers = #tpu.dot_dimension_numbers<[1], [0], [0], [1], [0, 0, 1, 1], [], []>} : vector<40x16xf32>, vector<16x32xf32>, vector<40x32xf32> -> vector<40x32xf32>
    %53 = arith.addf %44, %52 : vector<40x32xf32>
    %c2_i32 = arith.constant 2 : i32
    %54 = arith.addi %0, %c2_i32 : i32
    %c0_48 = arith.constant 0 : index
    %55 = arith.index_cast %54 : i32 to index
    %c0_49 = arith.constant 0 : index
    %c0_50 = arith.constant 0 : index
    %56 = vector.load %arg2[%c0_48, %55, %c0_49, %c0_50] : memref<1x7x10x16xf32, #tpu.memory_space<vmem>>, vector<1x5x8x16xf32>
    %57 = vector.shape_cast %56 : vector<1x5x8x16xf32> to vector<5x8x16xf32>
    %58 = vector.shape_cast %57 : vector<5x8x16xf32> to vector<40x16xf32>
    %c2_51 = arith.constant 2 : index
    %c0_52 = arith.constant 0 : index
    %c0_53 = arith.constant 0 : index
    %c0_54 = arith.constant 0 : index
    %59 = vector.load %arg3[%c2_51, %c0_52, %c0_53, %c0_54] : memref<3x3x16x32xf32, #tpu.memory_space<vmem>>, vector<1x1x16x32xf32>
    %60 = vector.shape_cast %59 : vector<1x1x16x32xf32> to vector<16x32xf32>
    %cst_55 = arith.constant dense<0.000000e+00> : vector<40x32xf32>
    %61 = tpu.matmul %58, %60, %cst_55 {dimension_numbers = #tpu.dot_dimension_numbers<[1], [0], [0], [1], [0, 0, 1, 1], [], []>} : vector<40x16xf32>, vector<16x32xf32>, vector<40x32xf32> -> vector<40x32xf32>
    %62 = arith.addf %53, %61 : vector<40x32xf32>
    %c2_i32_56 = arith.constant 2 : i32
    %63 = arith.addi %0, %c2_i32_56 : i32
    %c0_57 = arith.constant 0 : index
    %64 = arith.index_cast %63 : i32 to index
    %c1_58 = arith.constant 1 : index
    %c0_59 = arith.constant 0 : index
    %65 = vector.load %arg2[%c0_57, %64, %c1_58, %c0_59] : memref<1x7x10x16xf32, #tpu.memory_space<vmem>>, vector<1x5x8x16xf32>
    %66 = vector.shape_cast %65 : vector<1x5x8x16xf32> to vector<5x8x16xf32>
    %67 = vector.shape_cast %66 : vector<5x8x16xf32> to vector<40x16xf32>
    %c2_60 = arith.constant 2 : index
    %c1_61 = arith.constant 1 : index
    %c0_62 = arith.constant 0 : index
    %c0_63 = arith.constant 0 : index
    %68 = vector.load %arg3[%c2_60, %c1_61, %c0_62, %c0_63] : memref<3x3x16x32xf32, #tpu.memory_space<vmem>>, vector<1x1x16x32xf32>
    %69 = vector.shape_cast %68 : vector<1x1x16x32xf32> to vector<16x32xf32>
    %cst_64 = arith.constant dense<0.000000e+00> : vector<40x32xf32>
    %70 = tpu.matmul %67, %69, %cst_64 {dimension_numbers = #tpu.dot_dimension_numbers<[1], [0], [0], [1], [0, 0, 1, 1], [], []>} : vector<40x16xf32>, vector<16x32xf32>, vector<40x32xf32> -> vector<40x32xf32>
    %71 = arith.addf %62, %70 : vector<40x32xf32>
    %c2_i32_65 = arith.constant 2 : i32
    %72 = arith.addi %0, %c2_i32_65 : i32
    %c0_66 = arith.constant 0 : index
    %73 = arith.index_cast %72 : i32 to index
    %c2_67 = arith.constant 2 : index
    %c0_68 = arith.constant 0 : index
    %74 = vector.load %arg2[%c0_66, %73, %c2_67, %c0_68] : memref<1x7x10x16xf32, #tpu.memory_space<vmem>>, vector<1x5x8x16xf32>
    %75 = vector.shape_cast %74 : vector<1x5x8x16xf32> to vector<5x8x16xf32>
    %76 = vector.shape_cast %75 : vector<5x8x16xf32> to vector<40x16xf32>
    %c2_69 = arith.constant 2 : index
    %c2_70 = arith.constant 2 : index
    %c0_71 = arith.constant 0 : index
    %c0_72 = arith.constant 0 : index
    %77 = vector.load %arg3[%c2_69, %c2_70, %c0_71, %c0_72] : memref<3x3x16x32xf32, #tpu.memory_space<vmem>>, vector<1x1x16x32xf32>
    %78 = vector.shape_cast %77 : vector<1x1x16x32xf32> to vector<16x32xf32>
    %cst_73 = arith.constant dense<0.000000e+00> : vector<40x32xf32>
    %79 = tpu.matmul %76, %78, %cst_73 {dimension_numbers = #tpu.dot_dimension_numbers<[1], [0], [0], [1], [0, 0, 1, 1], [], []>} : vector<40x16xf32>, vector<16x32xf32>, vector<40x32xf32> -> vector<40x32xf32>
    %80 = arith.addf %71, %79 : vector<40x32xf32>
    %c0_74 = arith.constant 0 : index
    %c0_75 = arith.constant 0 : index
    %81 = vector.load %arg4[%c0_74, %c0_75] : memref<1x32xf32, #tpu.memory_space<vmem>>, vector<1x32xf32>
    %82 = vector.broadcast %81 : vector<1x32xf32> to vector<40x32xf32>
    %83 = arith.addf %80, %82 : vector<40x32xf32>
    %cst_76 = arith.constant 0.000000e+00 : f32
    %84 = vector.broadcast %cst_76 : f32 to vector<40x32xf32>
    %85 = arith.maximumf %83, %84 : vector<40x32xf32>
    %86 = vector.shape_cast %85 : vector<40x32xf32> to vector<5x8x32xf32>
    %87 = vector.extract_strided_slice %86 {offsets = [0, 0, 0], sizes = [5, 6, 32], strides = [1, 1, 1]} : vector<5x8x32xf32> to vector<5x6x32xf32>
    %c0_77 = arith.constant 0 : index
    %c0_78 = arith.constant 0 : index
    %c0_79 = arith.constant 0 : index
    %c0_80 = arith.constant 0 : index
    %88 = vector.load %arg5[%c0_77, %c0_78, %c0_79, %c0_80] : memref<1x5x6x32xf32, #tpu.memory_space<vmem>>, vector<1x5x6x32xf32>
    %89 = vector.shape_cast %88 : vector<1x5x6x32xf32> to vector<5x6x32xf32>
    %90 = arith.addf %87, %89 : vector<5x6x32xf32>
    %c0_81 = arith.constant 0 : index
    %c0_82 = arith.constant 0 : index
    %c0_83 = arith.constant 0 : index
    %c0_84 = arith.constant 0 : index
    %91 = vector.load %arg6[%c0_81, %c0_82, %c0_83, %c0_84] : memref<1x5x6x32xf32, #tpu.memory_space<vmem>>, vector<1x5x6x32xf32>
    %92 = vector.shape_cast %91 : vector<1x5x6x32xf32> to vector<5x6x32xf32>
    %93 = vector.shape_cast %90 : vector<5x6x32xf32> to vector<1x5x6x32xf32>
    tpu.vector_store %arg6[%c0_81, %c0_82, %c0_83, %c0_84], %93 {strides = array<i32>} : memref<1x5x6x32xf32, #tpu.memory_space<vmem>>, vector<1x5x6x32xf32>,
    return
  }
  func.func @transform_0(%arg0: i32, %arg1: i32) -> (i32, i32, i32, i32) {
    %c0_i32 = arith.constant 0 : i32
    %c0_i32_0 = arith.constant 0 : i32
    %c0_i32_1 = arith.constant 0 : i32
    %c0_i32_2 = arith.constant 0 : i32
    return %arg0, %c0_i32, %c0_i32_0, %c0_i32_1 : i32, i32, i32, i32
  }
  func.func @transform_1(%arg0: i32, %arg1: i32) -> (i32, i32, i32, i32) {
    %c0_i32 = arith.constant 0 : i32
    %c0_i32_0 = arith.constant 0 : i32
    %c0_i32_1 = arith.constant 0 : i32
    %c0_i32_2 = arith.constant 0 : i32
    %c0_i32_3 = arith.constant 0 : i32
    return %c0_i32, %c0_i32_0, %c0_i32_1, %c0_i32_2 : i32, i32, i32, i32
  }
  func.func @transform_2(%arg0: i32, %arg1: i32) -> (i32, i32) {
    %c0_i32 = arith.constant 0 : i32
    %c0_i32_0 = arith.constant 0 : i32
    %c0_i32_1 = arith.constant 0 : i32
    return %c0_i32, %c0_i32_0 : i32, i32
  }
  func.func @transform_3(%arg0: i32, %arg1: i32) -> (i32, i32, i32, i32) {
    %c0_i32 = arith.constant 0 : i32
    %c0_i32_0 = arith.constant 0 : i32
    %c0_i32_1 = arith.constant 0 : i32
    return %arg0, %arg1, %c0_i32, %c0_i32_0 : i32, i32, i32, i32
  }
  func.func @transform_4(%arg0: i32, %arg1: i32) -> (i32, i32, i32, i32) {
    %c0_i32 = arith.constant 0 : i32
    %c0_i32_0 = arith.constant 0 : i32
    %c0_i32_1 = arith.constant 0 : i32
    return %arg0, %arg1, %c0_i32, %c0_i32_0 : i32, i32, i32, i32
  }
}

</mosaic_0001>

<llo_original>
// kernel: tpu_custom_call.1
$region0: #{tpu_custom_call.1}
  #allocation0 [shape = 'u32[]', space=smem, size = 0x4, offset = 0x4, fixed_abs, tag = 'smem constant byte address 0x4 - core index']
  #allocation1 [shape = 'u32[144,128]{1,0:T(1,128)}', space=vmem, size = 0x12000, scoped, tag = 'internal scratch']
  %s0 = inlined_call_operand.vmem [shape: f32[2,7,10,16], index: 0, kind: input, shape index: {}]
  %s1 = inlined_call_operand.vmem [shape: f32[3,3,16,32], index: 1, kind: input, shape index: {}]
  %s2 = inlined_call_operand.vmem [shape: f32[1,32], index: 2, kind: input, shape index: {}]
  %s3 = inlined_call_operand.vmem [shape: f32[2,5,6,32], index: 3, kind: input, shape index: {}]
  %s4 = inlined_call_operand.vmem [shape: f32[2,5,6,32], index: 4, kind: output, shape index: {}]
  %s5 = sld [smem:[#allocation0]]
  $region49: #{tpu_custom_call.1} parent=0
    _
  %s7 = ssub.s32 1, %s5
  %s8 = scalar_select 0, %s7, %s5
  loop: start=0, step=1, limit=4
  $region2: #{tpu_custom_call.1} parent=0 // loop_pre_header
    _
  $region3: #{tpu_custom_call.1} parent=0 // loop_header
    %s10 = sphi 0, %s14
    %p11 = scmp.ge.s32.totalorder %s10, 4
    %s17 = sphi 0, %s29
    %s18 = sphi 0, %s25
    %s19 = sphi 0, %s17
    %s20 = sphi 0, %s18
    %s21 = sphi 0, %s19
    %s22 = sphi 0, %s20
    %s32 = sphi 0, %s34
    %s35 = sphi 0, %s32
    %s36 = sphi 0, %s35
    %s52 = sphi 0, %s36
    %s56 = sphi 0, %s56
    %s58 = sphi 0, %s56
    %s59 = sphi 0, %s58
    %s73 = sphi 0, %s59
    %s77 = sphi 0, %s77
    %s79 = sphi 0, %s77
    %s80 = sphi 0, %s79
    %s94 = sphi 0, %s80
    %s102 = sphi 0, %s104
    %s105 = sphi 0, %s102
    %s106 = sphi 0, %s105
    %s122 = sphi 0, %s106
    %s130 = sphi 0, %s132
    %s133 = sphi 0, %s130
    %s134 = sphi 0, %s133
    %s150 = sphi 0, %s134
  $region4: #{tpu_custom_call.1} parent=0 // loop_header_branch
    %13 = sbr.rel (%p11) target = $region8
  $region5: #{tpu_custom_call.1} parent=0 // loop_body
    %s15 = ssub.s32 %s10, 1
    %s16 = ssub.s32 %s10, 2
    %s23 = sadd.s32 1, %s18
    %p24 = scmp.ge.s32.totalorder %s23, 1
    %s25 = scalar_select %p24, 0, %s23
    %s26 = sadd.s32 1, %s17
    %s27 = scalar_select %p24, %s26, %s17
    %p28 = scmp.ge.s32.totalorder %s27, 2
    %s29 = scalar_select %p28, 0, %s27
    %s30 = ssub.s32 %s17, %s29
    %p31 = scmp.eq.s32.totalorder %s30, 0
    %s33 = sadd.s32 %s32, 1
    %s34 = scalar_select %p31, %s32, %s33
    %p37 = pneg %p31
    %p38 = scmp.eq.s32.totalorder %s10, 1
    %p39 = por %p37, %p38
    %p40 = scmp.ne.s32.totalorder %s32, %s35
    %p41 = scmp.eq.s32.totalorder %s10, 0
    %p42 = por %p40, %p41
    %p43 = scmp.ne.s32.totalorder %s32, %s35
    %p44 = scmp.eq.s32.totalorder %s15, 1
    %p45 = por %p43, %p44
    %p46 = scmp.ne.s32.totalorder %s35, %s36
    %p47 = scmp.eq.s32.totalorder %s15, 0
    %p48 = por %p46, %p47
    %p49 = scmp.ne.s32.totalorder %s35, %s36
    %p50 = scmp.eq.s32.totalorder %s16, 1
    %p51 = por %p49, %p50
    %p53 = scmp.ne.s32.totalorder %s36, %s52
    %p54 = scmp.eq.s32.totalorder %s16, 0
    %p55 = por %p53, %p54
    %s57 = sadd.s32 %s56, 1
    %p60 = scmp.eq.s32.totalorder %s10, 1
    %p61 = scmp.ne.s32.totalorder %s56, %s58
    %p62 = scmp.eq.s32.totalorder %s10, 0
    %p63 = por %p61, %p62
    %p64 = scmp.ne.s32.totalorder %s56, %s58
    %p65 = scmp.eq.s32.totalorder %s15, 1
    %p66 = por %p64, %p65
    %p67 = scmp.ne.s32.totalorder %s58, %s59
    %p68 = scmp.eq.s32.totalorder %s15, 0
    %p69 = por %p67, %p68
    %p70 = scmp.ne.s32.totalorder %s58, %s59
    %p71 = scmp.eq.s32.totalorder %s16, 1
    %p72 = por %p70, %p71
    %p74 = scmp.ne.s32.totalorder %s59, %s73
    %p75 = scmp.eq.s32.totalorder %s16, 0
    %p76 = por %p74, %p75
    %s78 = sadd.s32 %s77, 1
    %p81 = scmp.eq.s32.totalorder %s10, 1
    %p82 = scmp.ne.s32.totalorder %s77, %s79
    %p83 = scmp.eq.s32.totalorder %s10, 0
    %p84 = por %p82, %p83
    %p85 = scmp.ne.s32.totalorder %s77, %s79
    %p86 = scmp.eq.s32.totalorder %s15, 1
    %p87 = por %p85, %p86
    %p88 = scmp.ne.s32.totalorder %s79, %s80
    %p89 = scmp.eq.s32.totalorder %s15, 0
    %p90 = por %p88, %p89
    %p91 = scmp.ne.s32.totalorder %s79, %s80
    %p92 = scmp.eq.s32.totalorder %s16, 1
    %p93 = por %p91, %p92
    %p95 = scmp.ne.s32.totalorder %s80, %s94
    %p96 = scmp.eq.s32.totalorder %s16, 0
    %p97 = por %p95, %p96
    %s98 = ssub.s32 %s17, %s29
    %s99 = ssub.s32 %s18, %s25
    %s100 = sor.u32 %s98, %s99
    %p101 = scmp.eq.s32.totalorder %s100, 0
    %s103 = sadd.s32 %s102, 1
    %s104 = scalar_select %p101, %s102, %s103
    %p107 = pneg %p101
    %p108 = scmp.eq.s32.totalorder %s10, 1
    %p109 = por %p107, %p108
    %p110 = scmp.ne.s32.totalorder %s102, %s105
    %p111 = scmp.eq.s32.totalorder %s10, 0
    %p112 = por %p110, %p111
    %p113 = scmp.ne.s32.totalorder %s102, %s105
    %p114 = scmp.eq.s32.totalorder %s15, 1
    %p115 = por %p113, %p114
    %p116 = scmp.ne.s32.totalorder %s105, %s106
    %p117 = scmp.eq.s32.totalorder %s15, 0
    %p118 = por %p116, %p117
    %p119 = scmp.ne.s32.totalorder %s105, %s106
    %p120 = scmp.eq.s32.totalorder %s16, 1
    %p121 = por %p119, %p120
    %p123 = scmp.ne.s32.totalorder %s106, %s122
    %p124 = scmp.eq.s32.totalorder %s16, 0
    %p125 = por %p123, %p124
    %s126 = ssub.s32 %s17, %s29
    %s127 = ssub.s32 %s18, %s25
    %s128 = sor.u32 %s126, %s127
    %p129 = scmp.eq.s32.totalorder %s128, 0
    %s131 = sadd.s32 %s130, 1
    %s132 = scalar_select %p129, %s130, %s131
    %p135 = pneg %p129
    %p136 = scmp.eq.s32.totalorder %s10, 1
    %p137 = por %p135, %p136
    %p138 = scmp.ne.s32.totalorder %s130, %s133
    %p139 = scmp.eq.s32.totalorder %s10, 0
    %p140 = por %p138, %p139
    %p141 = scmp.ne.s32.totalorder %s130, %s133
    %p142 = scmp.eq.s32.totalorder %s15, 1
    %p143 = por %p141, %p142
    %p144 = scmp.ne.s32.totalorder %s133, %s134
    %p145 = scmp.eq.s32.totalorder %s15, 0
    %p146 = por %p144, %p145
    %p147 = scmp.ne.s32.totalorder %s133, %s134
    %p148 = scmp.eq.s32.totalorder %s16, 1
    %p149 = por %p147, %p148
    %p151 = scmp.ne.s32.totalorder %s134, %s150
    %p152 = scmp.eq.s32.totalorder %s16, 0
    %p153 = por %p151, %p152
    %p154 = scmp.le.s32.totalorder 1, %s10
    %p155 = scmp.lt.s32.totalorder %s10, 3
    %p156 = pnand %p154, %p155
    %p157 = pneg %p156
    // Predicated region
    $region9: #{tpu_custom_call.1} parent=5 // pred_check
      _
    $region10: #{tpu_custom_call.1} parent=5 // pred_check_branch
      %159 = sbr.rel (%p156) target = $region12
    $region11: #{tpu_custom_call.1} parent=5 // pred_region
      %s160 = ssub.s32 %s10, 1
      // Predicated region
      $region13: #{tpu_custom_call.1} parent=11 // pred_check
        %p161 = pneg %p69
      $region14: #{tpu_custom_call.1} parent=11 // pred_check_branch
        %163 = sbr.rel (%p161) target = $region16
      $region15: #{tpu_custom_call.1} parent=11 // pred_region
        _
      $region16: #{tpu_custom_call.1} parent=11 // pred_fallthru
        _
      // Predicated region
      $region17: #{tpu_custom_call.1} parent=11 // pred_check
        %p164 = pneg %p90
      $region18: #{tpu_custom_call.1} parent=11 // pred_check_branch
        %166 = sbr.rel (%p164) target = $region20
      $region19: #{tpu_custom_call.1} parent=11 // pred_region
        _
      $region20: #{tpu_custom_call.1} parent=11 // pred_fallthru
        _
    $region12: #{tpu_custom_call.1} parent=5 // pred_fallthru
      _
    %p167 = scmp.lt.s32.totalorder %s10, 2
    // Predicated region
    $region21: #{tpu_custom_call.1} parent=5 // pred_check
      %p168 = pneg %p167
    $region22: #{tpu_custom_call.1} parent=5 // pred_check_branch
      %170 = sbr.rel (%p168) target = $region24
    $region23: #{tpu_custom_call.1} parent=5 // pred_region
      // Predicated region
      $region25: #{tpu_custom_call.1} parent=23 // pred_check
        %p171 = pneg %p42
      $region26: #{tpu_custom_call.1} parent=23 // pred_check_branch
        %173 = sbr.rel (%p171) target = $region28
      $region27: #{tpu_custom_call.1} parent=23 // pred_region
        %p174 = scmp.lt.s32.totalorder %s17, 1
        %s175 = scalar_select %p174, %s17, 1
        %s176 = smul.addr %s175, 14
        %s177 = smul.addr %s176, 8
        %s178 = scalar_lea.vmem %s0, %s177
      $region28: #{tpu_custom_call.1} parent=23 // pred_fallthru
        _
      // Predicated region
      $region29: #{tpu_custom_call.1} parent=23 // pred_check
        %p179 = pneg %p112
      $region30: #{tpu_custom_call.1} parent=23 // pred_check_branch
        %181 = sbr.rel (%p179) target = $region32
      $region31: #{tpu_custom_call.1} parent=23 // pred_region
        %s182 = smul.u32 5, %s18
        %p183 = scmp.lt.s32.totalorder %s17, 1
        %s184 = scalar_select %p183, %s17, 1
        %p185 = scmp.lt.s32.totalorder %s182, 4
        %s186 = scalar_select %p185, %s182, 4
        %s187 = smul.addr %s184, 5
        %s188 = sadd.s32 %s186, %s187
        %s189 = smul.addr %s188, 8
        %s190 = scalar_lea.vmem %s3, %s189
        %s191 = smul.u32 5, %s18
      $region32: #{tpu_custom_call.1} parent=23 // pred_fallthru
        _
    $region24: #{tpu_custom_call.1} parent=5 // pred_fallthru
      _
    %p192 = scmp.le.s32.totalorder 1, %s10
    %p193 = scmp.lt.s32.totalorder %s10, 3
    %p194 = pnand %p192, %p193
    %p195 = pneg %p194
    // Predicated region
    $region33: #{tpu_custom_call.1} parent=5 // pred_check
      _
    $region34: #{tpu_custom_call.1} parent=5 // pred_check_branch
      %197 = sbr.rel (%p194) target = $region36
    $region35: #{tpu_custom_call.1} parent=5 // pred_region
      %s198 = ssub.s32 %s10, 1
      %p199 = scmp.lt.s32.totalorder %s19, 1
      %s200 = scalar_select %p199, %s19, 1
      %s201 = smul.addr %s200, 14
      %s202 = smul.addr %s201, 8
      %s203 = scalar_lea.vmem %s0, %s202
      %p204 = pneg %p48
      %p205 = pneg %p45
      %p206 = pneg %p69
      %p207 = pneg %p66
      %p208 = pneg %p90
      %p209 = pneg %p87
      %s210 = smul.u32 5, %s20
      %p211 = scmp.lt.s32.totalorder %s19, 1
      %s212 = scalar_select %p211, %s19, 1
      %p213 = scmp.lt.s32.totalorder %s210, 4
      %s214 = scalar_select %p213, %s210, 4
      %s215 = smul.addr %s212, 5
      %s216 = sadd.s32 %s214, %s215
      %s217 = smul.addr %s216, 8
      %s218 = scalar_lea.vmem %s3, %s217
      %p219 = pneg %p118
      %p220 = pneg %p115
      %p221 = pneg %p146
      %p222 = pneg %p143
      %s223 = smul.u32 5, %s20
      %p224 = scmp.lt.s32.totalorder %s19, 1
      %s225 = scalar_select %p224, %s19, 1
      %p226 = scmp.lt.s32.totalorder %s223, 4
      %s227 = scalar_select %p226, %s223, 4
      %s228 = smul.addr %s225, 5
      %s229 = sadd.s32 %s227, %s228
      %s230 = smul.addr %s229, 8
      %s231 = scalar_lea.vmem %s4, %s230
      %p232 = scmp.lt.s32.totalorder %s19, 1
      %s233 = scalar_select %p232, %s19, 1
      %s234 = smul.addr %s233, 14
      %s235 = smul.addr %s234, 8
      %s236 = scalar_lea.vmem %s0, %s235
      %s237 = smul.u32 5, %s20
      %p238 = scmp.lt.s32.totalorder %s19, 1
      %s239 = scalar_select %p238, %s19, 1
      %p240 = scmp.lt.s32.totalorder %s237, 4
      %s241 = scalar_select %p240, %s237, 4
      %s242 = smul.addr %s239, 5
      %s243 = sadd.s32 %s241, %s242
      %s244 = smul.addr %s243, 8
      %s245 = scalar_lea.vmem %s3, %s244
      %s246 = smul.u32 5, %s20
      %s247 = smul.u32 5, %s20
      %p248 = scmp.lt.s32.totalorder %s19, 1
      %s249 = scalar_select %p248, %s19, 1
      %p250 = scmp.lt.s32.totalorder %s247, 4
      %s251 = scalar_select %p250, %s247, 4
      %s252 = smul.addr %s249, 5
      %s253 = sadd.s32 %s251, %s252
      %s254 = smul.addr %s253, 8
      %s255 = scalar_lea.vmem %s4, %s254
      %s256 = smul.u32 5, %s20
      %s257 = smul.u32 %s20, 5
      %s258 = smul.u32 %s257, 16
      %s259 = scalar_lea.vmem %s236, %s258
      %v260 = vld [vmem:[%s259] sm:$0xff]
      %v261 = vld [vmem:[%s259 + $0x10] sm:$0xff]
      %v262 = vld [vmem:[%s259 + $0x20] sm:$0xff]
      %v263 = vld [vmem:[%s259 + $0x30] sm:$0xff]
      %v264 = vld [vmem:[%s259 + $0x40] sm:$0xff]
      %v265 = vld [vmem:[%s1] sm:$0xff]
      %v266 = vld [vmem:[%s1 + $0x8] sm:$0xff]
      %v267 = vld [vmem:[%s259 + $0x1] sm:$0xff]
      %v268 = vld [vmem:[%s259 + $0x11] sm:$0xff]
      %v269 = vld [vmem:[%s259 + $0x21] sm:$0xff]
      %v270 = vld [vmem:[%s259 + $0x31] sm:$0xff]
      %v271 = vld [vmem:[%s259 + $0x41] sm:$0xff]
      %s272 = scalar_lea.vmem %s1, 16
      %v273 = vld [vmem:[%s272] sm:$0xff]
      %v274 = vld [vmem:[%s272 + $0x8] sm:$0xff]
      %vm275 = vcmask 130048
      %v277 = vsel %vm275, %v267, 0
      %v280 = vsel %vm275, %v268, 0
      %v283 = vsel %vm275, %v269, 0
      %v286 = vsel %vm275, %v270, 0
      %v289 = vsel %vm275, %v271, 0
      %291 = vmatprep.subr.mxu0 0.0
      %292 = vmatpush1.msra.mxu0 0.0
      %293 = vmatprep.subr.mxu0 0.0
      %294 = vmatpush1.msra.mxu0 0.0
      %295 = vmatprep.subr.mxu0 0.0
      %296 = vmatpush1.msra.mxu0 0.0
      %297 = vmatprep.subr.mxu0 0.0
      %298 = vmatpush1.msra.mxu0 0.0
      %299 = vmatprep.subr.mxu0 0.0
      %300 = vmatpush1.msra.mxu0 0.0
      %301 = vmatprep.subr.mxu0 0.0
      %302 = vmatpush1.msra.mxu0 0.0
      %303 = vmatprep.subr.mxu0 0.0
      %304 = vmatpush1.msra.mxu0 0.0
      %305 = vmatprep.subr.mxu0 0.0
      %306 = vmatpush1.msra.mxu0 0.0
      %307 = vmatprep.subr.mxu0 0.0
      %308 = vmatpush1.msra.mxu0 0.0
      %309 = vmatprep.subr.mxu0 0.0
      %310 = vmatpush1.msra.mxu0 0.0
      %311 = vmatprep.subr.mxu0 0.0
      %312 = vmatpush1.msra.mxu0 0.0
      %313 = vmatprep.subr.mxu0 0.0
      %314 = vmatpush1.msra.mxu0 0.0
      %315 = vmatprep.subr.mxu0 0.0
      %316 = vmatpush1.msra.mxu0 0.0
      %317 = vmatprep.subr.mxu0 0.0
      %318 = vmatpush1.msra.mxu0 0.0
      %319 = vmatprep.subr.mxu0 0.0
      %320 = vmatpush1.msra.mxu0 %v274
      %321 = vmatprep.subr.mxu0 0.0
      %322 = vmatpush1.msra.mxu0 %v273
      %323 = vmatprep.subr.mxu0 0.0
      %324 = vmatpush2.msra.mxu0 0.0
      %325 = vmatprep.subr.mxu0 0.0
      %326 = vmatpush2.msra.mxu0 0.0
      %327 = vmatprep.subr.mxu0 0.0
      %328 = vmatpush2.msra.mxu0 0.0
      %329 = vmatprep.subr.mxu0 0.0
      %330 = vmatpush2.msra.mxu0 0.0
      %331 = vmatprep.subr.mxu0 0.0
      %332 = vmatpush2.msra.mxu0 0.0
      %333 = vmatprep.subr.mxu0 0.0
      %334 = vmatpush2.msra.mxu0 0.0
      %335 = vmatprep.subr.mxu0 0.0
      %336 = vmatpush2.msra.mxu0 0.0
      %337 = vmatprep.subr.mxu0 0.0
      %338 = vmatpush2.msra.mxu0 0.0
      %339 = vmatprep.subr.mxu0 0.0
      %340 = vmatpush2.msra.mxu0 0.0
      %341 = vmatprep.subr.mxu0 0.0
      %342 = vmatpush2.msra.mxu0 0.0
      %343 = vmatprep.subr.mxu0 0.0
      %344 = vmatpush2.msra.mxu0 0.0
      %345 = vmatprep.subr.mxu0 0.0
      %346 = vmatpush2.msra.mxu0 0.0
      %347 = vmatprep.subr.mxu0 0.0
      %348 = vmatpush2.msra.mxu0 0.0
      %349 = vmatprep.subr.mxu0 0.0
      %350 = vmatpush2.msra.mxu0 0.0
      %351 = vmatprep.subr.mxu0 0.0
      %352 = vmatpush2.msra.mxu0 0.0
      %353 = vmatprep.subr.mxu0 0.0
      %354 = vmatpush2.msra.mxu0 0.0
      %355 = vmatprep.mubr.f32.mxu0 0.0
      %356 = vmatmul.mubr.f32.gmra.mxu0 %v277
      %v357 = vpop.f32.mrf.mxu0
      %v358 = vadd.f32 0.0, %v357
      %v359 = vpop.f32.mrf.mxu0
      %360 = vmatprep.mubr.f32.mxu0 0.0
      %361 = vmatmul.mubr.f32.gmra.mxu0 %v280
      %v362 = vpop.f32.mrf.mxu0
      %v363 = vadd.f32 0.0, %v362
      %v364 = vpop.f32.mrf.mxu0
      %365 = vmatprep.mubr.f32.mxu0 0.0
      %366 = vmatmul.mubr.f32.gmra.mxu0 %v283
      %v367 = vpop.f32.mrf.mxu0
      %v368 = vadd.f32 0.0, %v367
      %v369 = vpop.f32.mrf.mxu0
      %370 = vmatprep.mubr.f32.mxu0 0.0
      %371 = vmatmul.mubr.f32.gmra.mxu0 %v286
      %v372 = vpop.f32.mrf.mxu0
      %v373 = vadd.f32 0.0, %v372
      %v374 = vpop.f32.mrf.mxu0
      %375 = vmatprep.mubr.f32.mxu0 0.0
      %376 = vmatmul.mubr.f32.gmra.mxu0 %v289
      %v377 = vpop.f32.mrf.mxu0
      %v378 = vadd.f32 0.0, %v377
      %v379 = vpop.f32.mrf.mxu0
      %380 = vdwg.mxu0
      %v382 = vsel %vm275, %v260, 0
      %v385 = vsel %vm275, %v261, 0
      %v388 = vsel %vm275, %v262, 0
      %v391 = vsel %vm275, %v263, 0
      %v394 = vsel %vm275, %v264, 0
      %396 = vmatprep.subr.mxu0 0.0
      %397 = vmatpush1.msra.mxu0 0.0
      %398 = vmatprep.subr.mxu0 0.0
      %399 = vmatpush1.msra.mxu0 0.0
      %400 = vmatprep.subr.mxu0 0.0
      %401 = vmatpush1.msra.mxu0 0.0
      %402 = vmatprep.subr.mxu0 0.0
      %403 = vmatpush1.msra.mxu0 0.0
      %404 = vmatprep.subr.mxu0 0.0
      %405 = vmatpush1.msra.mxu0 0.0
      %406 = vmatprep.subr.mxu0 0.0
      %407 = vmatpush1.msra.mxu0 0.0
      %408 = vmatprep.subr.mxu0 0.0
      %409 = vmatpush1.msra.mxu0 0.0
      %410 = vmatprep.subr.mxu0 0.0
      %411 = vmatpush1.msra.mxu0 0.0
      %412 = vmatprep.subr.mxu0 0.0
      %413 = vmatpush1.msra.mxu0 0.0
      %414 = vmatprep.subr.mxu0 0.0
      %415 = vmatpush1.msra.mxu0 0.0
      %416 = vmatprep.subr.mxu0 0.0
      %417 = vmatpush1.msra.mxu0 0.0
      %418 = vmatprep.subr.mxu0 0.0
      %419 = vmatpush1.msra.mxu0 0.0
      %420 = vmatprep.subr.mxu0 0.0
      %421 = vmatpush1.msra.mxu0 0.0
      %422 = vmatprep.subr.mxu0 0.0
      %423 = vmatpush1.msra.mxu0 0.0
      %424 = vmatprep.subr.mxu0 0.0
      %425 = vmatpush1.msra.mxu0 %v266
      %426 = vmatprep.subr.mxu0 0.0
      %427 = vmatpush1.msra.mxu0 %v265
      %428 = vmatprep.subr.mxu0 0.0
      %429 = vmatpush2.msra.mxu0 0.0
      %430 = vmatprep.subr.mxu0 0.0
      %431 = vmatpush2.msra.mxu0 0.0
      %432 = vmatprep.subr.mxu0 0.0
      %433 = vmatpush2.msra.mxu0 0.0
      %434 = vmatprep.subr.mxu0 0.0
      %435 = vmatpush2.msra.mxu0 0.0
      %436 = vmatprep.subr.mxu0 0.0
      %437 = vmatpush2.msra.mxu0 0.0
      %438 = vmatprep.subr.mxu0 0.0
      %439 = vmatpush2.msra.mxu0 0.0
      %440 = vmatprep.subr.mxu0 0.0
      %441 = vmatpush2.msra.mxu0 0.0
      %442 = vmatprep.subr.mxu0 0.0
      %443 = vmatpush2.msra.mxu0 0.0
      %444 = vmatprep.subr.mxu0 0.0
      %445 = vmatpush2.msra.mxu0 0.0
      %446 = vmatprep.subr.mxu0 0.0
      %447 = vmatpush2.msra.mxu0 0.0
      %448 = vmatprep.subr.mxu0 0.0
      %449 = vmatpush2.msra.mxu0 0.0
      %450 = vmatprep.subr.mxu0 0.0
      %451 = vmatpush2.msra.mxu0 0.0
      %452 = vmatprep.subr.mxu0 0.0
      %453 = vmatpush2.msra.mxu0 0.0
      %454 = vmatprep.subr.mxu0 0.0
      %455 = vmatpush2.msra.mxu0 0.0
      %456 = vmatprep.subr.mxu0 0.0
      %457 = vmatpush2.msra.mxu0 0.0
      %458 = vmatprep.subr.mxu0 0.0
      %459 = vmatpush2.msra.mxu0 0.0
      %460 = vmatprep.mubr.f32.mxu0 0.0
      %461 = vmatmul.mubr.f32.gmra.mxu0 %v382
      %v462 = vpop.f32.mrf.mxu0
      %v463 = vadd.f32 %v358, %v462
      %v464 = vpop.f32.mrf.mxu0
      %465 = vmatprep.mubr.f32.mxu0 0.0
      %466 = vmatmul.mubr.f32.gmra.mxu0 %v385
      %v467 = vpop.f32.mrf.mxu0
      %v468 = vadd.f32 %v363, %v467
      %v469 = vpop.f32.mrf.mxu0
      %470 = vmatprep.mubr.f32.mxu0 0.0
      %471 = vmatmul.mubr.f32.gmra.mxu0 %v388
      %v472 = vpop.f32.mrf.mxu0
      %v473 = vadd.f32 %v368, %v472
      %v474 = vpop.f32.mrf.mxu0
      %475 = vmatprep.mubr.f32.mxu0 0.0
      %476 = vmatmul.mubr.f32.gmra.mxu0 %v391
      %v477 = vpop.f32.mrf.mxu0
      %v478 = vadd.f32 %v373, %v477
      %v479 = vpop.f32.mrf.mxu0
      %480 = vmatprep.mubr.f32.mxu0 0.0
      %481 = vmatmul.mubr.f32.gmra.mxu0 %v394
      %v482 = vpop.f32.mrf.mxu0
      %v483 = vadd.f32 %v378, %v482
      %v484 = vpop.f32.mrf.mxu0
      %485 = vdwg.mxu0
      %v486 = vld [vmem:[%s259 + $0x2] sm:$0xff]
      %v487 = vld [vmem:[%s259 + $0x12] sm:$0xff]
      %v488 = vld [vmem:[%s259 + $0x22] sm:$0xff]
      %v489 = vld [vmem:[%s259 + $0x32] sm:$0xff]
      %v490 = vld [vmem:[%s259 + $0x42] sm:$0xff]
      %s491 = scalar_lea.vmem %s1, 32
      %v492 = vld [vmem:[%s491] sm:$0xff]
      %v493 = vld [vmem:[%s491 + $0x8] sm:$0xff]
      %v495 = vsel %vm275, %v486, 0
      %v498 = vsel %vm275, %v487, 0
      %v501 = vsel %vm275, %v488, 0
      %v504 = vsel %vm275, %v489, 0
      %v507 = vsel %vm275, %v490, 0
      %509 = vmatprep.subr.mxu0 0.0
      %510 = vmatpush1.msra.mxu0 0.0
      %511 = vmatprep.subr.mxu0 0.0
      %512 = vmatpush1.msra.mxu0 0.0
      %513 = vmatprep.subr.mxu0 0.0
      %514 = vmatpush1.msra.mxu0 0.0
      %515 = vmatprep.subr.mxu0 0.0
      %516 = vmatpush1.msra.mxu0 0.0
      %517 = vmatprep.subr.mxu0 0.0
      %518 = vmatpush1.msra.mxu0 0.0
      %519 = vmatprep.subr.mxu0 0.0
      %520 = vmatpush1.msra.mxu0 0.0
      %521 = vmatprep.subr.mxu0 0.0
      %522 = vmatpush1.msra.mxu0 0.0
      %523 = vmatprep.subr.mxu0 0.0
      %524 = vmatpush1.msra.mxu0 0.0
      %525 = vmatprep.subr.mxu0 0.0
      %526 = vmatpush1.msra.mxu0 0.0
      %527 = vmatprep.subr.mxu0 0.0
      %528 = vmatpush1.msra.mxu0 0.0
      %529 = vmatprep.subr.mxu0 0.0
      %530 = vmatpush1.msra.mxu0 0.0
      %531 = vmatprep.subr.mxu0 0.0
      %532 = vmatpush1.msra.mxu0 0.0
      %533 = vmatprep.subr.mxu0 0.0
      %534 = vmatpush1.msra.mxu0 0.0
      %535 = vmatprep.subr.mxu0 0.0
      %536 = vmatpush1.msra.mxu0 0.0
      %537 = vmatprep.subr.mxu0 0.0
      %538 = vmatpush1.msra.mxu0 %v493
      %539 = vmatprep.subr.mxu0 0.0
      %540 = vmatpush1.msra.mxu0 %v492
      %541 = vmatprep.subr.mxu0 0.0
      %542 = vmatpush2.msra.mxu0 0.0
      %543 = vmatprep.subr.mxu0 0.0
      %544 = vmatpush2.msra.mxu0 0.0
      %545 = vmatprep.subr.mxu0 0.0
      %546 = vmatpush2.msra.mxu0 0.0
      %547 = vmatprep.subr.mxu0 0.0
      %548 = vmatpush2.msra.mxu0 0.0
      %549 = vmatprep.subr.mxu0 0.0
      %550 = vmatpush2.msra.mxu0 0.0
      %551 = vmatprep.subr.mxu0 0.0
      %552 = vmatpush2.msra.mxu0 0.0
      %553 = vmatprep.subr.mxu0 0.0
      %554 = vmatpush2.msra.mxu0 0.0
      %555 = vmatprep.subr.mxu0 0.0
      %556 = vmatpush2.msra.mxu0 0.0
      %557 = vmatprep.subr.mxu0 0.0
      %558 = vmatpush2.msra.mxu0 0.0
      %559 = vmatprep.subr.mxu0 0.0
      %560 = vmatpush2.msra.mxu0 0.0
      %561 = vmatprep.subr.mxu0 0.0
      %562 = vmatpush2.msra.mxu0 0.0
      %563 = vmatprep.subr.mxu0 0.0
      %564 = vmatpush2.msra.mxu0 0.0
      %565 = vmatprep.subr.mxu0 0.0
      %566 = vmatpush2.msra.mxu0 0.0
      %567 = vmatprep.subr.mxu0 0.0
      %568 = vmatpush2.msra.mxu0 0.0
      %569 = vmatprep.subr.mxu0 0.0
      %570 = vmatpush2.msra.mxu0 0.0
      %571 = vmatprep.subr.mxu0 0.0
      %572 = vmatpush2.msra.mxu0 0.0
      %573 = vmatprep.mubr.f32.mxu0 0.0
      %574 = vmatmul.mubr.f32.gmra.mxu0 %v495
      %v575 = vpop.f32.mrf.mxu0
      %v576 = vadd.f32 0.0, %v575
      %v577 = vpop.f32.mrf.mxu0
      %578 = vmatprep.mubr.f32.mxu0 0.0
      %579 = vmatmul.mubr.f32.gmra.mxu0 %v498
      %v580 = vpop.f32.mrf.mxu0
      %v581 = vadd.f32 0.0, %v580
      %v582 = vpop.f32.mrf.mxu0
      %583 = vmatprep.mubr.f32.mxu0 0.0
      %584 = vmatmul.mubr.f32.gmra.mxu0 %v501
      %v585 = vpop.f32.mrf.mxu0
      %v586 = vadd.f32 0.0, %v585
      %v587 = vpop.f32.mrf.mxu0
      %588 = vmatprep.mubr.f32.mxu0 0.0
      %589 = vmatmul.mubr.f32.gmra.mxu0 %v504
      %v590 = vpop.f32.mrf.mxu0
      %v591 = vadd.f32 0.0, %v590
      %v592 = vpop.f32.mrf.mxu0
      %593 = vmatprep.mubr.f32.mxu0 0.0
      %594 = vmatmul.mubr.f32.gmra.mxu0 %v507
      %v595 = vpop.f32.mrf.mxu0
      %v596 = vadd.f32 0.0, %v595
      %v597 = vpop.f32.mrf.mxu0
      %598 = vdwg.mxu0
      %v599 = vadd.f32 %v463, %v576
      %v600 = vadd.f32 %v468, %v581
      %v601 = vadd.f32 %v473, %v586
      %v602 = vadd.f32 %v478, %v591
      %v603 = vadd.f32 %v483, %v596
      %s604 = sadd.s32 %s257, 1
      %s605 = smul.u32 %s604, 16
      %s606 = scalar_lea.vmem %s236, %s605
      %v607 = vld [vmem:[%s606] sm:$0xff]
      %v608 = vld [vmem:[%s606 + $0x10] sm:$0xff]
      %v609 = vld [vmem:[%s606 + $0x20] sm:$0xff]
      %v610 = vld [vmem:[%s606 + $0x30] sm:$0xff]
      %v611 = vld [vmem:[%s606 + $0x40] sm:$0xff]
      %s612 = scalar_lea.vmem %s1, 48
      %v613 = vld [vmem:[%s612] sm:$0xff]
      %v614 = vld [vmem:[%s612 + $0x8] sm:$0xff]
      %v616 = vsel %vm275, %v607, 0
      %v619 = vsel %vm275, %v608, 0
      %v622 = vsel %vm275, %v609, 0
      %v625 = vsel %vm275, %v610, 0
      %v628 = vsel %vm275, %v611, 0
      %630 = vmatprep.subr.mxu0 0.0
      %631 = vmatpush1.msra.mxu0 0.0
      %632 = vmatprep.subr.mxu0 0.0
      %633 = vmatpush1.msra.mxu0 0.0
      %634 = vmatprep.subr.mxu0 0.0
      %635 = vmatpush1.msra.mxu0 0.0
      %636 = vmatprep.subr.mxu0 0.0
      %637 = vmatpush1.msra.mxu0 0.0
      %638 = vmatprep.subr.mxu0 0.0
      %639 = vmatpush1.msra.mxu0 0.0
      %640 = vmatprep.subr.mxu0 0.0
      %641 = vmatpush1.msra.mxu0 0.0
      %642 = vmatprep.subr.mxu0 0.0
      %643 = vmatpush1.msra.mxu0 0.0
      %644 = vmatprep.subr.mxu0 0.0
      %645 = vmatpush1.msra.mxu0 0.0
      %646 = vmatprep.subr.mxu0 0.0
      %647 = vmatpush1.msra.mxu0 0.0
      %648 = vmatprep.subr.mxu0 0.0
      %649 = vmatpush1.msra.mxu0 0.0
      %650 = vmatprep.subr.mxu0 0.0
      %651 = vmatpush1.msra.mxu0 0.0
      %652 = vmatprep.subr.mxu0 0.0
      %653 = vmatpush1.msra.mxu0 0.0
      %654 = vmatprep.subr.mxu0 0.0
      %655 = vmatpush1.msra.mxu0 0.0
      %656 = vmatprep.subr.mxu0 0.0
      %657 = vmatpush1.msra.mxu0 0.0
      %658 = vmatprep.subr.mxu0 0.0
      %659 = vmatpush1.msra.mxu0 %v614
      %660 = vmatprep.subr.mxu0 0.0
      %661 = vmatpush1.msra.mxu0 %v613
      %662 = vmatprep.subr.mxu0 0.0
      %663 = vmatpush2.msra.mxu0 0.0
      %664 = vmatprep.subr.mxu0 0.0
      %665 = vmatpush2.msra.mxu0 0.0
      %666 = vmatprep.subr.mxu0 0.0
      %667 = vmatpush2.msra.mxu0 0.0
      %668 = vmatprep.subr.mxu0 0.0
      %669 = vmatpush2.msra.mxu0 0.0
      %670 = vmatprep.subr.mxu0 0.0
      %671 = vmatpush2.msra.mxu0 0.0
      %672 = vmatprep.subr.mxu0 0.0
      %673 = vmatpush2.msra.mxu0 0.0
      %674 = vmatprep.subr.mxu0 0.0
      %675 = vmatpush2.msra.mxu0 0.0
      %676 = vmatprep.subr.mxu0 0.0
      %677 = vmatpush2.msra.mxu0 0.0
      %678 = vmatprep.subr.mxu0 0.0
      %679 = vmatpush2.msra.mxu0 0.0
      %680 = vmatprep.subr.mxu0 0.0
      %681 = vmatpush2.msra.mxu0 0.0
      %682 = vmatprep.subr.mxu0 0.0
      %683 = vmatpush2.msra.mxu0 0.0
      %684 = vmatprep.subr.mxu0 0.0
      %685 = vmatpush2.msra.mxu0 0.0
      %686 = vmatprep.subr.mxu0 0.0
      %687 = vmatpush2.msra.mxu0 0.0
      %688 = vmatprep.subr.mxu0 0.0
      %689 = vmatpush2.msra.mxu0 0.0
      %690 = vmatprep.subr.mxu0 0.0
      %691 = vmatpush2.msra.mxu0 0.0
      %692 = vmatprep.subr.mxu0 0.0
      %693 = vmatpush2.msra.mxu0 0.0
      %694 = vmatprep.mubr.f32.mxu0 0.0
      %695 = vmatmul.mubr.f32.gmra.mxu0 %v616
      %v696 = vpop.f32.mrf.mxu0
      %v697 = vadd.f32 0.0, %v696
      %v698 = vpop.f32.mrf.mxu0
      %699 = vmatprep.mubr.f32.mxu0 0.0
      %700 = vmatmul.mubr.f32.gmra.mxu0 %v619
      %v701 = vpop.f32.mrf.mxu0
      %v702 = vadd.f32 0.0, %v701
      %v703 = vpop.f32.mrf.mxu0
      %704 = vmatprep.mubr.f32.mxu0 0.0
      %705 = vmatmul.mubr.f32.gmra.mxu0 %v622
      %v706 = vpop.f32.mrf.mxu0
      %v707 = vadd.f32 0.0, %v706
      %v708 = vpop.f32.mrf.mxu0
      %709 = vmatprep.mubr.f32.mxu0 0.0
      %710 = vmatmul.mubr.f32.gmra.mxu0 %v625
      %v711 = vpop.f32.mrf.mxu0
      %v712 = vadd.f32 0.0, %v711
      %v713 = vpop.f32.mrf.mxu0
      %714 = vmatprep.mubr.f32.mxu0 0.0
      %715 = vmatmul.mubr.f32.gmra.mxu0 %v628
      %v716 = vpop.f32.mrf.mxu0
      %v717 = vadd.f32 0.0, %v716
      %v718 = vpop.f32.mrf.mxu0
      %719 = vdwg.mxu0
      %v720 = vadd.f32 %v599, %v697
      %v721 = vadd.f32 %v600, %v702
      %v722 = vadd.f32 %v601, %v707
      %v723 = vadd.f32 %v602, %v712
      %v724 = vadd.f32 %v603, %v717
      %v725 = vld [vmem:[%s606 + $0x1] sm:$0xff]
      %v726 = vld [vmem:[%s606 + $0x11] sm:$0xff]
      %v727 = vld [vmem:[%s606 + $0x21] sm:$0xff]
      %v728 = vld [vmem:[%s606 + $0x31] sm:$0xff]
      %v729 = vld [vmem:[%s606 + $0x41] sm:$0xff]
      %s730 = scalar_lea.vmem %s1, 64
      %v731 = vld [vmem:[%s730] sm:$0xff]
      %v732 = vld [vmem:[%s730 + $0x8] sm:$0xff]
      %v734 = vsel %vm275, %v725, 0
      %v737 = vsel %vm275, %v726, 0
      %v740 = vsel %vm275, %v727, 0
      %v743 = vsel %vm275, %v728, 0
      %v746 = vsel %vm275, %v729, 0
      %748 = vmatprep.subr.mxu0 0.0
      %749 = vmatpush1.msra.mxu0 0.0
      %750 = vmatprep.subr.mxu0 0.0
      %751 = vmatpush1.msra.mxu0 0.0
      %752 = vmatprep.subr.mxu0 0.0
      %753 = vmatpush1.msra.mxu0 0.0
      %754 = vmatprep.subr.mxu0 0.0
      %755 = vmatpush1.msra.mxu0 0.0
      %756 = vmatprep.subr.mxu0 0.0
      %757 = vmatpush1.msra.mxu0 0.0
      %758 = vmatprep.subr.mxu0 0.0
      %759 = vmatpush1.msra.mxu0 0.0
      %760 = vmatprep.subr.mxu0 0.0
      %761 = vmatpush1.msra.mxu0 0.0
      %762 = vmatprep.subr.mxu0 0.0
      %763 = vmatpush1.msra.mxu0 0.0
      %764 = vmatprep.subr.mxu0 0.0
      %765 = vmatpush1.msra.mxu0 0.0
      %766 = vmatprep.subr.mxu0 0.0
      %767 = vmatpush1.msra.mxu0 0.0
      %768 = vmatprep.subr.mxu0 0.0
      %769 = vmatpush1.msra.mxu0 0.0
      %770 = vmatprep.subr.mxu0 0.0
      %771 = vmatpush1.msra.mxu0 0.0
      %772 = vmatprep.subr.mxu0 0.0
      %773 = vmatpush1.msra.mxu0 0.0
      %774 = vmatprep.subr.mxu0 0.0
      %775 = vmatpush1.msra.mxu0 0.0
      %776 = vmatprep.subr.mxu0 0.0
      %777 = vmatpush1.msra.mxu0 %v732
      %778 = vmatprep.subr.mxu0 0.0
      %779 = vmatpush1.msra.mxu0 %v731
      %780 = vmatprep.subr.mxu0 0.0
      %781 = vmatpush2.msra.mxu0 0.0
      %782 = vmatprep.subr.mxu0 0.0
      %783 = vmatpush2.msra.mxu0 0.0
      %784 = vmatprep.subr.mxu0 0.0
      %785 = vmatpush2.msra.mxu0 0.0
      %786 = vmatprep.subr.mxu0 0.0
      %787 = vmatpush2.msra.mxu0 0.0
      %788 = vmatprep.subr.mxu0 0.0
      %789 = vmatpush2.msra.mxu0 0.0
      %790 = vmatprep.subr.mxu0 0.0
      %791 = vmatpush2.msra.mxu0 0.0
      %792 = vmatprep.subr.mxu0 0.0
      %793 = vmatpush2.msra.mxu0 0.0
      %794 = vmatprep.subr.mxu0 0.0
      %795 = vmatpush2.msra.mxu0 0.0
      %796 = vmatprep.subr.mxu0 0.0
      %797 = vmatpush2.msra.mxu0 0.0
      %798 = vmatprep.subr.mxu0 0.0
      %799 = vmatpush2.msra.mxu0 0.0
      %800 = vmatprep.subr.mxu0 0.0
      %801 = vmatpush2.msra.mxu0 0.0
      %802 = vmatprep.subr.mxu0 0.0
      %803 = vmatpush2.msra.mxu0 0.0
      %804 = vmatprep.subr.mxu0 0.0
      %805 = vmatpush2.msra.mxu0 0.0
      %806 = vmatprep.subr.mxu0 0.0
      %807 = vmatpush2.msra.mxu0 0.0
      %808 = vmatprep.subr.mxu0 0.0
      %809 = vmatpush2.msra.mxu0 0.0
      %810 = vmatprep.subr.mxu0 0.0
      %811 = vmatpush2.msra.mxu0 0.0
      %812 = vmatprep.mubr.f32.mxu0 0.0
      %813 = vmatmul.mubr.f32.gmra.mxu0 %v734
      %v814 = vpop.f32.mrf.mxu0
      %v815 = vadd.f32 0.0, %v814
      %v816 = vpop.f32.mrf.mxu0
      %817 = vmatprep.mubr.f32.mxu0 0.0
      %818 = vmatmul.mubr.f32.gmra.mxu0 %v737
      %v819 = vpop.f32.mrf.mxu0
      %v820 = vadd.f32 0.0, %v819
      %v821 = vpop.f32.mrf.mxu0
      %822 = vmatprep.mubr.f32.mxu0 0.0
      %823 = vmatmul.mubr.f32.gmra.mxu0 %v740
      %v824 = vpop.f32.mrf.mxu0
      %v825 = vadd.f32 0.0, %v824
      %v826 = vpop.f32.mrf.mxu0
      %827 = vmatprep.mubr.f32.mxu0 0.0
      %828 = vmatmul.mubr.f32.gmra.mxu0 %v743
      %v829 = vpop.f32.mrf.mxu0
      %v830 = vadd.f32 0.0, %v829
      %v831 = vpop.f32.mrf.mxu0
      %832 = vmatprep.mubr.f32.mxu0 0.0
      %833 = vmatmul.mubr.f32.gmra.mxu0 %v746
      %v834 = vpop.f32.mrf.mxu0
      %v835 = vadd.f32 0.0, %v834
      %v836 = vpop.f32.mrf.mxu0
      %837 = vdwg.mxu0
      %v838 = vadd.f32 %v720, %v815
      %v839 = vadd.f32 %v721, %v820
      %v840 = vadd.f32 %v722, %v825
      %v841 = vadd.f32 %v723, %v830
      %v842 = vadd.f32 %v724, %v835
      %v843 = vld [vmem:[%s606 + $0x2] sm:$0xff]
      %v844 = vld [vmem:[%s606 + $0x12] sm:$0xff]
      %v845 = vld [vmem:[%s606 + $0x22] sm:$0xff]
      %v846 = vld [vmem:[%s606 + $0x32] sm:$0xff]
      %v847 = vld [vmem:[%s606 + $0x42] sm:$0xff]
      %s848 = scalar_lea.vmem %s1, 80
      %v849 = vld [vmem:[%s848] sm:$0xff]
      %v850 = vld [vmem:[%s848 + $0x8] sm:$0xff]
      %v852 = vsel %vm275, %v843, 0
      %v855 = vsel %vm275, %v844, 0
      %v858 = vsel %vm275, %v845, 0
      %v861 = vsel %vm275, %v846, 0
      %v864 = vsel %vm275, %v847, 0
      %866 = vmatprep.subr.mxu0 0.0
      %867 = vmatpush1.msra.mxu0 0.0
      %868 = vmatprep.subr.mxu0 0.0
      %869 = vmatpush1.msra.mxu0 0.0
      %870 = vmatprep.subr.mxu0 0.0
      %871 = vmatpush1.msra.mxu0 0.0
      %872 = vmatprep.subr.mxu0 0.0
      %873 = vmatpush1.msra.mxu0 0.0
      %874 = vmatprep.subr.mxu0 0.0
      %875 = vmatpush1.msra.mxu0 0.0
      %876 = vmatprep.subr.mxu0 0.0
      %877 = vmatpush1.msra.mxu0 0.0
      %878 = vmatprep.subr.mxu0 0.0
      %879 = vmatpush1.msra.mxu0 0.0
      %880 = vmatprep.subr.mxu0 0.0
      %881 = vmatpush1.msra.mxu0 0.0
      %882 = vmatprep.subr.mxu0 0.0
      %883 = vmatpush1.msra.mxu0 0.0
      %884 = vmatprep.subr.mxu0 0.0
      %885 = vmatpush1.msra.mxu0 0.0
      %886 = vmatprep.subr.mxu0 0.0
      %887 = vmatpush1.msra.mxu0 0.0
      %888 = vmatprep.subr.mxu0 0.0
      %889 = vmatpush1.msra.mxu0 0.0
      %890 = vmatprep.subr.mxu0 0.0
      %891 = vmatpush1.msra.mxu0 0.0
      %892 = vmatprep.subr.mxu0 0.0
      %893 = vmatpush1.msra.mxu0 0.0
      %894 = vmatprep.subr.mxu0 0.0
      %895 = vmatpush1.msra.mxu0 %v850
      %896 = vmatprep.subr.mxu0 0.0
      %897 = vmatpush1.msra.mxu0 %v849
      %898 = vmatprep.subr.mxu0 0.0
      %899 = vmatpush2.msra.mxu0 0.0
      %900 = vmatprep.subr.mxu0 0.0
      %901 = vmatpush2.msra.mxu0 0.0
      %902 = vmatprep.subr.mxu0 0.0
      %903 = vmatpush2.msra.mxu0 0.0
      %904 = vmatprep.subr.mxu0 0.0
      %905 = vmatpush2.msra.mxu0 0.0
      %906 = vmatprep.subr.mxu0 0.0
      %907 = vmatpush2.msra.mxu0 0.0
      %908 = vmatprep.subr.mxu0 0.0
      %909 = vmatpush2.msra.mxu0 0.0
      %910 = vmatprep.subr.mxu0 0.0
      %911 = vmatpush2.msra.mxu0 0.0
      %912 = vmatprep.subr.mxu0 0.0
      %913 = vmatpush2.msra.mxu0 0.0
      %914 = vmatprep.subr.mxu0 0.0
      %915 = vmatpush2.msra.mxu0 0.0
      %916 = vmatprep.subr.mxu0 0.0
      %917 = vmatpush2.msra.mxu0 0.0
      %918 = vmatprep.subr.mxu0 0.0
      %919 = vmatpush2.msra.mxu0 0.0
      %920 = vmatprep.subr.mxu0 0.0
      %921 = vmatpush2.msra.mxu0 0.0
      %922 = vmatprep.subr.mxu0 0.0
      %923 = vmatpush2.msra.mxu0 0.0
      %924 = vmatprep.subr.mxu0 0.0
      %925 = vmatpush2.msra.mxu0 0.0
      %926 = vmatprep.subr.mxu0 0.0
      %927 = vmatpush2.msra.mxu0 0.0
      %928 = vmatprep.subr.mxu0 0.0
      %929 = vmatpush2.msra.mxu0 0.0
      %930 = vmatprep.mubr.f32.mxu0 0.0
      %931 = vmatmul.mubr.f32.gmra.mxu0 %v852
      %v932 = vpop.f32.mrf.mxu0
      %v933 = vadd.f32 0.0, %v932
      %v934 = vpop.f32.mrf.mxu0
      %935 = vmatprep.mubr.f32.mxu0 0.0
      %936 = vmatmul.mubr.f32.gmra.mxu0 %v855
      %v937 = vpop.f32.mrf.mxu0
      %v938 = vadd.f32 0.0, %v937
      %v939 = vpop.f32.mrf.mxu0
      %940 = vmatprep.mubr.f32.mxu0 0.0
      %941 = vmatmul.mubr.f32.gmra.mxu0 %v858
      %v942 = vpop.f32.mrf.mxu0
      %v943 = vadd.f32 0.0, %v942
      %v944 = vpop.f32.mrf.mxu0
      %945 = vmatprep.mubr.f32.mxu0 0.0
      %946 = vmatmul.mubr.f32.gmra.mxu0 %v861
      %v947 = vpop.f32.mrf.mxu0
      %v948 = vadd.f32 0.0, %v947
      %v949 = vpop.f32.mrf.mxu0
      %950 = vmatprep.mubr.f32.mxu0 0.0
      %951 = vmatmul.mubr.f32.gmra.mxu0 %v864
      %v952 = vpop.f32.mrf.mxu0
      %v953 = vadd.f32 0.0, %v952
      %v954 = vpop.f32.mrf.mxu0
      %955 = vdwg.mxu0
      %v956 = vadd.f32 %v838, %v933
      %v957 = vadd.f32 %v839, %v938
      %v958 = vadd.f32 %v840, %v943
      %v959 = vadd.f32 %v841, %v948
      %v960 = vadd.f32 %v842, %v953
      %s961 = sadd.s32 %s257, 2
      %s962 = smul.u32 %s961, 16
      %s963 = scalar_lea.vmem %s236, %s962
      %v964 = vld [vmem:[%s963] sm:$0xff]
      %v965 = vld [vmem:[%s963 + $0x10] sm:$0xff]
      %v966 = vld [vmem:[%s963 + $0x20] sm:$0xff]
      %v967 = vld [vmem:[%s963 + $0x30] sm:$0xff]
      %v968 = vld [vmem:[%s963 + $0x40] sm:$0xff]
      %s969 = scalar_lea.vmem %s1, 96
      %v970 = vld [vmem:[%s969] sm:$0xff]
      %v971 = vld [vmem:[%s969 + $0x8] sm:$0xff]
      %v973 = vsel %vm275, %v964, 0
      %v976 = vsel %vm275, %v965, 0
      %v979 = vsel %vm275, %v966, 0
      %v982 = vsel %vm275, %v967, 0
      %v985 = vsel %vm275, %v968, 0
      %987 = vmatprep.subr.mxu0 0.0
      %988 = vmatpush1.msra.mxu0 0.0
      %989 = vmatprep.subr.mxu0 0.0
      %990 = vmatpush1.msra.mxu0 0.0
      %991 = vmatprep.subr.mxu0 0.0
      %992 = vmatpush1.msra.mxu0 0.0
      %993 = vmatprep.subr.mxu0 0.0
      %994 = vmatpush1.msra.mxu0 0.0
      %995 = vmatprep.subr.mxu0 0.0
      %996 = vmatpush1.msra.mxu0 0.0
      %997 = vmatprep.subr.mxu0 0.0
      %998 = vmatpush1.msra.mxu0 0.0
      %999 = vmatprep.subr.mxu0 0.0
      %1000 = vmatpush1.msra.mxu0 0.0
      %1001 = vmatprep.subr.mxu0 0.0
      %1002 = vmatpush1.msra.mxu0 0.0
      %1003 = vmatprep.subr.mxu0 0.0
      %1004 = vmatpush1.msra.mxu0 0.0
      %1005 = vmatprep.subr.mxu0 0.0
      %1006 = vmatpush1.msra.mxu0 0.0
      %1007 = vmatprep.subr.mxu0 0.0
      %1008 = vmatpush1.msra.mxu0 0.0
      %1009 = vmatprep.subr.mxu0 0.0
      %1010 = vmatpush1.msra.mxu0 0.0
      %1011 = vmatprep.subr.mxu0 0.0
      %1012 = vmatpush1.msra.mxu0 0.0
      %1013 = vmatprep.subr.mxu0 0.0
      %1014 = vmatpush1.msra.mxu0 0.0
      %1015 = vmatprep.subr.mxu0 0.0
      %1016 = vmatpush1.msra.mxu0 %v971
      %1017 = vmatprep.subr.mxu0 0.0
      %1018 = vmatpush1.msra.mxu0 %v970
      %1019 = vmatprep.subr.mxu0 0.0
      %1020 = vmatpush2.msra.mxu0 0.0
      %1021 = vmatprep.subr.mxu0 0.0
      %1022 = vmatpush2.msra.mxu0 0.0
      %1023 = vmatprep.subr.mxu0 0.0
      %1024 = vmatpush2.msra.mxu0 0.0
      %1025 = vmatprep.subr.mxu0 0.0
      %1026 = vmatpush2.msra.mxu0 0.0
      %1027 = vmatprep.subr.mxu0 0.0
      %1028 = vmatpush2.msra.mxu0 0.0
      %1029 = vmatprep.subr.mxu0 0.0
      %1030 = vmatpush2.msra.mxu0 0.0
      %1031 = vmatprep.subr.mxu0 0.0
      %1032 = vmatpush2.msra.mxu0 0.0
      %1033 = vmatprep.subr.mxu0 0.0
      %1034 = vmatpush2.msra.mxu0 0.0
      %1035 = vmatprep.subr.mxu0 0.0
      %1036 = vmatpush2.msra.mxu0 0.0
      %1037 = vmatprep.subr.mxu0 0.0
      %1038 = vmatpush2.msra.mxu0 0.0
      %1039 = vmatprep.subr.mxu0 0.0
      %1040 = vmatpush2.msra.mxu0 0.0
      %1041 = vmatprep.subr.mxu0 0.0
      %1042 = vmatpush2.msra.mxu0 0.0
      %1043 = vmatprep.subr.mxu0 0.0
      %1044 = vmatpush2.msra.mxu0 0.0
      %1045 = vmatprep.subr.mxu0 0.0
      %1046 = vmatpush2.msra.mxu0 0.0
      %1047 = vmatprep.subr.mxu0 0.0
      %1048 = vmatpush2.msra.mxu0 0.0
      %1049 = vmatprep.subr.mxu0 0.0
      %1050 = vmatpush2.msra.mxu0 0.0
      %1051 = vmatprep.mubr.f32.mxu0 0.0
      %1052 = vmatmul.mubr.f32.gmra.mxu0 %v973
      %v1053 = vpop.f32.mrf.mxu0
      %v1054 = vadd.f32 0.0, %v1053
      %v1055 = vpop.f32.mrf.mxu0
      %1056 = vmatprep.mubr.f32.mxu0 0.0
      %1057 = vmatmul.mubr.f32.gmra.mxu0 %v976
      %v1058 = vpop.f32.mrf.mxu0
      %v1059 = vadd.f32 0.0, %v1058
      %v1060 = vpop.f32.mrf.mxu0
      %1061 = vmatprep.mubr.f32.mxu0 0.0
      %1062 = vmatmul.mubr.f32.gmra.mxu0 %v979
      %v1063 = vpop.f32.mrf.mxu0
      %v1064 = vadd.f32 0.0, %v1063
      %v1065 = vpop.f32.mrf.mxu0
      %1066 = vmatprep.mubr.f32.mxu0 0.0
      %1067 = vmatmul.mubr.f32.gmra.mxu0 %v982
      %v1068 = vpop.f32.mrf.mxu0
      %v1069 = vadd.f32 0.0, %v1068
      %v1070 = vpop.f32.mrf.mxu0
      %1071 = vmatprep.mubr.f32.mxu0 0.0
      %1072 = vmatmul.mubr.f32.gmra.mxu0 %v985
      %v1073 = vpop.f32.mrf.mxu0
      %v1074 = vadd.f32 0.0, %v1073
      %v1075 = vpop.f32.mrf.mxu0
      %1076 = vdwg.mxu0
      %v1077 = vadd.f32 %v956, %v1054
      %v1078 = vadd.f32 %v957, %v1059
      %v1079 = vadd.f32 %v958, %v1064
      %v1080 = vadd.f32 %v959, %v1069
      %v1081 = vadd.f32 %v960, %v1074
      %v1082 = vld [vmem:[%s963 + $0x1] sm:$0xff]
      %v1083 = vld [vmem:[%s963 + $0x11] sm:$0xff]
      %v1084 = vld [vmem:[%s963 + $0x21] sm:$0xff]
      %v1085 = vld [vmem:[%s963 + $0x31] sm:$0xff]
      %v1086 = vld [vmem:[%s963 + $0x41] sm:$0xff]
      %s1087 = scalar_lea.vmem %s1, 112
      %v1088 = vld [vmem:[%s1087] sm:$0xff]
      %v1089 = vld [vmem:[%s1087 + $0x8] sm:$0xff]
      %v1091 = vsel %vm275, %v1082, 0
      %v1094 = vsel %vm275, %v1083, 0
      %v1097 = vsel %vm275, %v1084, 0
      %v1100 = vsel %vm275, %v1085, 0
      %v1103 = vsel %vm275, %v1086, 0
      %1105 = vmatprep.subr.mxu0 0.0
      %1106 = vmatpush1.msra.mxu0 0.0
      %1107 = vmatprep.subr.mxu0 0.0
      %1108 = vmatpush1.msra.mxu0 0.0
      %1109 = vmatprep.subr.mxu0 0.0
      %1110 = vmatpush1.msra.mxu0 0.0
      %1111 = vmatprep.subr.mxu0 0.0
      %1112 = vmatpush1.msra.mxu0 0.0
      %1113 = vmatprep.subr.mxu0 0.0
      %1114 = vmatpush1.msra.mxu0 0.0
      %1115 = vmatprep.subr.mxu0 0.0
      %1116 = vmatpush1.msra.mxu0 0.0
      %1117 = vmatprep.subr.mxu0 0.0
      %1118 = vmatpush1.msra.mxu0 0.0
      %1119 = vmatprep.subr.mxu0 0.0
      %1120 = vmatpush1.msra.mxu0 0.0
      %1121 = vmatprep.subr.mxu0 0.0
      %1122 = vmatpush1.msra.mxu0 0.0
      %1123 = vmatprep.subr.mxu0 0.0
      %1124 = vmatpush1.msra.mxu0 0.0
      %1125 = vmatprep.subr.mxu0 0.0
      %1126 = vmatpush1.msra.mxu0 0.0
      %1127 = vmatprep.subr.mxu0 0.0
      %1128 = vmatpush1.msra.mxu0 0.0
      %1129 = vmatprep.subr.mxu0 0.0
      %1130 = vmatpush1.msra.mxu0 0.0
      %1131 = vmatprep.subr.mxu0 0.0
      %1132 = vmatpush1.msra.mxu0 0.0
      %1133 = vmatprep.subr.mxu0 0.0
      %1134 = vmatpush1.msra.mxu0 %v1089
      %1135 = vmatprep.subr.mxu0 0.0
      %1136 = vmatpush1.msra.mxu0 %v1088
      %1137 = vmatprep.subr.mxu0 0.0
      %1138 = vmatpush2.msra.mxu0 0.0
      %1139 = vmatprep.subr.mxu0 0.0
      %1140 = vmatpush2.msra.mxu0 0.0
      %1141 = vmatprep.subr.mxu0 0.0
      %1142 = vmatpush2.msra.mxu0 0.0
      %1143 = vmatprep.subr.mxu0 0.0
      %1144 = vmatpush2.msra.mxu0 0.0
      %1145 = vmatprep.subr.mxu0 0.0
      %1146 = vmatpush2.msra.mxu0 0.0
      %1147 = vmatprep.subr.mxu0 0.0
      %1148 = vmatpush2.msra.mxu0 0.0
      %1149 = vmatprep.subr.mxu0 0.0
      %1150 = vmatpush2.msra.mxu0 0.0
      %1151 = vmatprep.subr.mxu0 0.0
      %1152 = vmatpush2.msra.mxu0 0.0
      %1153 = vmatprep.subr.mxu0 0.0
      %1154 = vmatpush2.msra.mxu0 0.0
      %1155 = vmatprep.subr.mxu0 0.0
      %1156 = vmatpush2.msra.mxu0 0.0
      %1157 = vmatprep.subr.mxu0 0.0
      %1158 = vmatpush2.msra.mxu0 0.0
      %1159 = vmatprep.subr.mxu0 0.0
      %1160 = vmatpush2.msra.mxu0 0.0
      %1161 = vmatprep.subr.mxu0 0.0
      %1162 = vmatpush2.msra.mxu0 0.0
      %1163 = vmatprep.subr.mxu0 0.0
      %1164 = vmatpush2.msra.mxu0 0.0
      %1165 = vmatprep.subr.mxu0 0.0
      %1166 = vmatpush2.msra.mxu0 0.0
      %1167 = vmatprep.subr.mxu0 0.0
      %1168 = vmatpush2.msra.mxu0 0.0
      %1169 = vmatprep.mubr.f32.mxu0 0.0
      %1170 = vmatmul.mubr.f32.gmra.mxu0 %v1091
      %v1171 = vpop.f32.mrf.mxu0
      %v1172 = vadd.f32 0.0, %v1171
      %v1173 = vpop.f32.mrf.mxu0
      %1174 = vmatprep.mubr.f32.mxu0 0.0
      %1175 = vmatmul.mubr.f32.gmra.mxu0 %v1094
      %v1176 = vpop.f32.mrf.mxu0
      %v1177 = vadd.f32 0.0, %v1176
      %v1178 = vpop.f32.mrf.mxu0
      %1179 = vmatprep.mubr.f32.mxu0 0.0
      %1180 = vmatmul.mubr.f32.gmra.mxu0 %v1097
      %v1181 = vpop.f32.mrf.mxu0
      %v1182 = vadd.f32 0.0, %v1181
      %v1183 = vpop.f32.mrf.mxu0
      %1184 = vmatprep.mubr.f32.mxu0 0.0
      %1185 = vmatmul.mubr.f32.gmra.mxu0 %v1100
      %v1186 = vpop.f32.mrf.mxu0
      %v1187 = vadd.f32 0.0, %v1186
      %v1188 = vpop.f32.mrf.mxu0
      %1189 = vmatprep.mubr.f32.mxu0 0.0
      %1190 = vmatmul.mubr.f32.gmra.mxu0 %v1103
      %v1191 = vpop.f32.mrf.mxu0
      %v1192 = vadd.f32 0.0, %v1191
      %v1193 = vpop.f32.mrf.mxu0
      %1194 = vdwg.mxu0
      %v1195 = vadd.f32 %v1077, %v1172
      %v1196 = vadd.f32 %v1078, %v1177
      %v1197 = vadd.f32 %v1079, %v1182
      %v1198 = vadd.f32 %v1080, %v1187
      %v1199 = vadd.f32 %v1081, %v1192
      %v1200 = vld [vmem:[%s963 + $0x2] sm:$0xff]
      %v1201 = vld [vmem:[%s963 + $0x12] sm:$0xff]
      %v1202 = vld [vmem:[%s963 + $0x22] sm:$0xff]
      %v1203 = vld [vmem:[%s963 + $0x32] sm:$0xff]
      %v1204 = vld [vmem:[%s963 + $0x42] sm:$0xff]
      %s1205 = scalar_lea.vmem %s1, 128
      %v1206 = vld [vmem:[%s1205] sm:$0xff]
      %v1207 = vld [vmem:[%s1205 + $0x8] sm:$0xff]
      %v1209 = vsel %vm275, %v1200, 0
      %v1212 = vsel %vm275, %v1201, 0
      %v1215 = vsel %vm275, %v1202, 0
      %v1218 = vsel %vm275, %v1203, 0
      %v1221 = vsel %vm275, %v1204, 0
      %1223 = vmatprep.subr.mxu0 0.0
      %1224 = vmatpush1.msra.mxu0 0.0
      %1225 = vmatprep.subr.mxu0 0.0
      %1226 = vmatpush1.msra.mxu0 0.0
      %1227 = vmatprep.subr.mxu0 0.0
      %1228 = vmatpush1.msra.mxu0 0.0
      %1229 = vmatprep.subr.mxu0 0.0
      %1230 = vmatpush1.msra.mxu0 0.0
      %1231 = vmatprep.subr.mxu0 0.0
      %1232 = vmatpush1.msra.mxu0 0.0
      %1233 = vmatprep.subr.mxu0 0.0
      %1234 = vmatpush1.msra.mxu0 0.0
      %1235 = vmatprep.subr.mxu0 0.0
      %1236 = vmatpush1.msra.mxu0 0.0
      %1237 = vmatprep.subr.mxu0 0.0
      %1238 = vmatpush1.msra.mxu0 0.0
      %1239 = vmatprep.subr.mxu0 0.0
      %1240 = vmatpush1.msra.mxu0 0.0
      %1241 = vmatprep.subr.mxu0 0.0
      %1242 = vmatpush1.msra.mxu0 0.0
      %1243 = vmatprep.subr.mxu0 0.0
      %1244 = vmatpush1.msra.mxu0 0.0
      %1245 = vmatprep.subr.mxu0 0.0
      %1246 = vmatpush1.msra.mxu0 0.0
      %1247 = vmatprep.subr.mxu0 0.0
      %1248 = vmatpush1.msra.mxu0 0.0
      %1249 = vmatprep.subr.mxu0 0.0
      %1250 = vmatpush1.msra.mxu0 0.0
      %1251 = vmatprep.subr.mxu0 0.0
      %1252 = vmatpush1.msra.mxu0 %v1207
      %1253 = vmatprep.subr.mxu0 0.0
      %1254 = vmatpush1.msra.mxu0 %v1206
      %1255 = vmatprep.subr.mxu0 0.0
      %1256 = vmatpush2.msra.mxu0 0.0
      %1257 = vmatprep.subr.mxu0 0.0
      %1258 = vmatpush2.msra.mxu0 0.0
      %1259 = vmatprep.subr.mxu0 0.0
      %1260 = vmatpush2.msra.mxu0 0.0
      %1261 = vmatprep.subr.mxu0 0.0
      %1262 = vmatpush2.msra.mxu0 0.0
      %1263 = vmatprep.subr.mxu0 0.0
      %1264 = vmatpush2.msra.mxu0 0.0
      %1265 = vmatprep.subr.mxu0 0.0
      %1266 = vmatpush2.msra.mxu0 0.0
      %1267 = vmatprep.subr.mxu0 0.0
      %1268 = vmatpush2.msra.mxu0 0.0
      %1269 = vmatprep.subr.mxu0 0.0
      %1270 = vmatpush2.msra.mxu0 0.0
      %1271 = vmatprep.subr.mxu0 0.0
      %1272 = vmatpush2.msra.mxu0 0.0
      %1273 = vmatprep.subr.mxu0 0.0
      %1274 = vmatpush2.msra.mxu0 0.0
      %1275 = vmatprep.subr.mxu0 0.0
      %1276 = vmatpush2.msra.mxu0 0.0
      %1277 = vmatprep.subr.mxu0 0.0
      %1278 = vmatpush2.msra.mxu0 0.0
      %1279 = vmatprep.subr.mxu0 0.0
      %1280 = vmatpush2.msra.mxu0 0.0
      %1281 = vmatprep.subr.mxu0 0.0
      %1282 = vmatpush2.msra.mxu0 0.0
      %1283 = vmatprep.subr.mxu0 0.0
      %1284 = vmatpush2.msra.mxu0 0.0
      %1285 = vmatprep.subr.mxu0 0.0
      %1286 = vmatpush2.msra.mxu0 0.0
      %1287 = vmatprep.mubr.f32.mxu0 0.0
      %1288 = vmatmul.mubr.f32.gmra.mxu0 %v1209
      %v1289 = vpop.f32.mrf.mxu0
      %v1290 = vadd.f32 0.0, %v1289
      %v1291 = vpop.f32.mrf.mxu0
      %1292 = vmatprep.mubr.f32.mxu0 0.0
      %1293 = vmatmul.mubr.f32.gmra.mxu0 %v1212
      %v1294 = vpop.f32.mrf.mxu0
      %v1295 = vadd.f32 0.0, %v1294
      %v1296 = vpop.f32.mrf.mxu0
      %1297 = vmatprep.mubr.f32.mxu0 0.0
      %1298 = vmatmul.mubr.f32.gmra.mxu0 %v1215
      %v1299 = vpop.f32.mrf.mxu0
      %v1300 = vadd.f32 0.0, %v1299
      %v1301 = vpop.f32.mrf.mxu0
      %1302 = vmatprep.mubr.f32.mxu0 0.0
      %1303 = vmatmul.mubr.f32.gmra.mxu0 %v1218
      %v1304 = vpop.f32.mrf.mxu0
      %v1305 = vadd.f32 0.0, %v1304
      %v1306 = vpop.f32.mrf.mxu0
      %1307 = vmatprep.mubr.f32.mxu0 0.0
      %1308 = vmatmul.mubr.f32.gmra.mxu0 %v1221
      %v1309 = vpop.f32.mrf.mxu0
      %v1310 = vadd.f32 0.0, %v1309
      %v1311 = vpop.f32.mrf.mxu0
      %1312 = vdwg.mxu0
      %v1313 = vadd.f32 %v1195, %v1290
      %v1314 = vadd.f32 %v1196, %v1295
      %v1315 = vadd.f32 %v1197, %v1300
      %v1316 = vadd.f32 %v1198, %v1305
      %v1317 = vadd.f32 %v1199, %v1310
      %v1318 = vld [vmem:[%s2] sm:$0x1]
      %v1320 = vlaneseq
      %v1321 = vshrl.u32 %v1320, 7
      %v1322 = vsub.s32 0, %v1321
      %v1323 = vrot.slane %v1318, %v1322
      %v1325 = vadd.f32 %v1313, %v1323
      %v1326 = vadd.f32 %v1314, %v1323
      %v1327 = vadd.f32 %v1315, %v1323
      %v1328 = vadd.f32 %v1316, %v1323
      %v1329 = vadd.f32 %v1317, %v1323
      %v1330 = vmax.f32 %v1325, 0.0
      %v1331 = vmax.f32 %v1326, 0.0
      %v1332 = vmax.f32 %v1327, 0.0
      %v1333 = vmax.f32 %v1328, 0.0
      %v1334 = vmax.f32 %v1329, 0.0
      %v1335 = vld [vmem:[%s245] sm:$0x3f]
      %v1336 = vld [vmem:[%s245 + $0x8] sm:$0x3f]
      %v1337 = vld [vmem:[%s245 + $0x10] sm:$0x3f]
      %v1338 = vld [vmem:[%s245 + $0x18] sm:$0x3f]
      %v1339 = vld [vmem:[%s245 + $0x20] sm:$0x3f]
      %v1340 = vadd.f32 %v1330, %v1335
      %v1341 = vadd.f32 %v1331, %v1336
      %v1342 = vadd.f32 %v1332, %v1337
      %v1343 = vadd.f32 %v1333, %v1338
      %v1344 = vadd.f32 %v1334, %v1339
      %vm1345 = vcmask 259072
      %1346 = vst.msk [vmem:[%s255] sm:$0x3f] %vm1345, %v1340
      %1347 = vst.msk [vmem:[%s255 + $0x8] sm:$0x3f] %vm1345, %v1341
      %1348 = vst.msk [vmem:[%s255 + $0x10] sm:$0x3f] %vm1345, %v1342
      %1349 = vst.msk [vmem:[%s255 + $0x18] sm:$0x3f] %vm1345, %v1343
      %1350 = vst.msk [vmem:[%s255 + $0x20] sm:$0x3f] %vm1345, %v1344
      %s1351 = smul.u32 5, %s20
      %p1352 = scmp.lt.s32.totalorder %s19, 1
      %s1353 = scalar_select %p1352, %s19, 1
      %p1354 = scmp.lt.s32.totalorder %s1351, 4
      %s1355 = scalar_select %p1354, %s1351, 4
      %s1356 = smul.addr %s1353, 5
      %s1357 = sadd.s32 %s1355, %s1356
      %s1358 = smul.addr %s1357, 8
      %s1359 = scalar_lea.vmem %s4, %s1358
      // Predicated region
      $region37: #{tpu_custom_call.1} parent=35 // pred_check
        %p1360 = pneg %p143
      $region38: #{tpu_custom_call.1} parent=35 // pred_check_branch
        %1362 = sbr.rel (%p1360) target = $region40
      $region39: #{tpu_custom_call.1} parent=35 // pred_region
        %s1363 = smul.u32 5, %s20
      $region40: #{tpu_custom_call.1} parent=35 // pred_fallthru
        _
    $region36: #{tpu_custom_call.1} parent=5 // pred_fallthru
      _
    %p1364 = scmp.le.s32.totalorder 2, %s10
    // Predicated region
    $region41: #{tpu_custom_call.1} parent=5 // pred_check
      %p1365 = pneg %p1364
    $region42: #{tpu_custom_call.1} parent=5 // pred_check_branch
      %1367 = sbr.rel (%p1365) target = $region44
    $region43: #{tpu_custom_call.1} parent=5 // pred_region
      %s1368 = ssub.s32 %s10, 2
      // Predicated region
      $region45: #{tpu_custom_call.1} parent=43 // pred_check
        %p1369 = pneg %p149
      $region46: #{tpu_custom_call.1} parent=43 // pred_check_branch
        %1371 = sbr.rel (%p1369) target = $region48
      $region47: #{tpu_custom_call.1} parent=43 // pred_region
        %s1372 = smul.u32 5, %s22
        %p1373 = scmp.lt.s32.totalorder %s21, 1
        %s1374 = scalar_select %p1373, %s21, 1
        %p1375 = scmp.lt.s32.totalorder %s1372, 4
        %s1376 = scalar_select %p1375, %s1372, 4
        %s1377 = smul.addr %s1374, 5
        %s1378 = sadd.s32 %s1376, %s1377
        %s1379 = smul.addr %s1378, 8
        %s1380 = scalar_lea.vmem %s4, %s1379
      $region48: #{tpu_custom_call.1} parent=43 // pred_fallthru
        _
    $region44: #{tpu_custom_call.1} parent=5 // pred_fallthru
      _
  $region6: #{tpu_custom_call.1} parent=0 // loop_footer
    %s14 = sadd.s32 1, %s10
  $region7: #{tpu_custom_call.1} parent=0 // loop_footer_branch
    %9 = sbr.rel target = $region3
  $region8: #{tpu_custom_call.1} parent=0 // loop_exit
    _

</llo_original>
